<compile_context>
chip_gen: v7x
topology: tpu7x:2x2x1
jax: 0.10.0
libtpu: 0.0.40
codegen_flags: <defaults>
</compile_context>

<pallas_src>
import functools

import jax
import jax.numpy as jnp
from jax import lax
from jax.experimental import pallas as pl
from jax.experimental.pallas import tpu as pltpu


def _round_up(x, m):
    return (x + m - 1) // m * m


def _pick_time_block(T, max_tb=32):
    """Largest divisor of T that is <= max_tb (timesteps per grid step)."""
    for tb in range(min(T, max_tb), 0, -1):
        if T % tb == 0:
            return tb
    return 1


# ----------------------------------------------------------------------------
# Fused kernel: RNN recurrence + output projection.
# One grid step handles TB consecutive time steps; the hidden state is carried
# across grid steps in a VMEM scratch buffer (the grid iterates sequentially).
# ----------------------------------------------------------------------------
def fused_rnn_kernel(xw_ref, whh_ref, wout_ref, bout_ref, h0_ref,
                     logits_ref, hN_ref, h_scratch, *, tb, compute_dtype):
    i = pl.program_id(0)

    @pl.when(i == 0)
    def _():
        h_scratch[...] = h0_ref[...].astype(jnp.float32)

    whh = whh_ref[...]          # (Hp, Hp)  compute_dtype
    wout = wout_ref[...]        # (Hp, Vp)  compute_dtype
    bout = bout_ref[...]        # (1, Vp)   f32

    def step(t, h):
        # xw already contains one_hot(x) @ W_ih^T + b_ih + b_hh  (f32, exact).
        pre = xw_ref[t] + jnp.dot(h.astype(compute_dtype), whh,
                                  preferred_element_type=jnp.float32)
        h_new = jnp.tanh(pre)                                   # (Bp, Hp) f32
        logits_ref[t] = (
            jnp.dot(h_new.astype(compute_dtype), wout,
                    preferred_element_type=jnp.float32) + bout)  # (Bp, Vp) f32
        return h_new

    h = lax.fori_loop(0, tb, step, h_scratch[...], unroll=True)
    h_scratch[...] = h

    @pl.when(i == pl.num_programs(0) - 1)
    def _():
        hN_ref[...] = h


def rnn_fused_forward(xw, w_hh_t, w_out_t, b_out, h0, *, tb, compute_dtype):
    """xw: (T, Bp, Hp) f32 precomputed input projection (+ folded RNN biases),
    w_hh_t: (Hp, Hp), w_out_t: (Hp, Vp) in compute_dtype, b_out: (1, Vp) f32,
    h0: (Bp, Hp) f32.  Returns logits (T, Bp, Vp) f32 and h_final (Bp, Hp) f32."""
    T, Bp, Hp = xw.shape
    Vp = w_out_t.shape[1]
    assert T % tb == 0

    kernel = functools.partial(fused_rnn_kernel, tb=tb,
                               compute_dtype=compute_dtype)
    return pl.pallas_call(
        kernel,
        out_shape=(
            jax.ShapeDtypeStruct((T, Bp, Vp), jnp.float32),
            jax.ShapeDtypeStruct((Bp, Hp), jnp.float32),
        ),
        grid_spec=pltpu.PrefetchScalarGridSpec(
            num_scalar_prefetch=0,
            grid=(T // tb,),
            in_specs=[
                pl.BlockSpec((tb, Bp, Hp), lambda i: (i, 0, 0)),   # xw
                pl.BlockSpec((Hp, Hp), lambda i: (0, 0)),          # W_hh^T
                pl.BlockSpec((Hp, Vp), lambda i: (0, 0)),          # W_out^T
                pl.BlockSpec((1, Vp), lambda i: (0, 0)),           # b_out
                pl.BlockSpec((Bp, Hp), lambda i: (0, 0)),          # h0
            ],
            out_specs=(
                pl.BlockSpec((tb, Bp, Vp), lambda i: (i, 0, 0)),   # logits
                pl.BlockSpec((Bp, Hp), lambda i: (0, 0)),          # h_final
            ),
            scratch_shapes=[pltpu.VMEM((Bp, Hp), jnp.float32)],
        ),
        compiler_params=pltpu.CompilerParams(
            dimension_semantics=("arbitrary",)),    # time axis is a recurrence
    )(xw, w_hh_t, w_out_t, b_out, h0)


# ----------------------------------------------------------------------------
# RNN_Moduel forward (layout plumbing in JAX; hot path in the fused kernel)
# ----------------------------------------------------------------------------
def rnn_module_forward(params, x_tokens, hidden_state, *,
                       compute_dtype=jnp.bfloat16, time_block=None):
    """x_tokens: (B, T) int32; hidden_state: (1, B, H).
    Returns (logits (T*B, V), hidden_state (1, B, H)) like the PyTorch module."""
    H, V = params["w_ih"].shape            # w_ih: (hidden, vocab)
    B, T = x_tokens.shape

    Bp = _round_up(B, 8)                   # sublane-align batch
    Hp = _round_up(H, 128)                 # lane-align hidden
    Vp = _round_up(V, 128)                 # lane-align vocab
    tb = _pick_time_block(T) if time_block is None else time_block
    assert T % tb == 0

    # Input projection hoisted out of the recurrence:
    #   one_hot(x.T, V) @ W_ih^T  ==  W_ih^T[x.T]   (exact gather)
    rnn_bias = (params["b_ih"] + params["b_hh"]).astype(jnp.float32)   # (H,)
    xw = jnp.take(params["w_ih"].T.astype(jnp.float32),
                  x_tokens.T, axis=0) + rnn_bias                       # (T, B, H)
    xw = jnp.pad(xw, ((0, 0), (0, Bp - B), (0, Hp - H)))               # (T, Bp, Hp)

    # Zero-padding of the recurrent / output weights is exact (padded hidden
    # columns stay 0, padded vocab columns are sliced off below).
    w_hh_t = jnp.pad(params["w_hh"].T,
                     ((0, Hp - H), (0, Hp - H))).astype(compute_dtype)
    w_out_t = jnp.pad(params["w_out"].T,
                      ((0, Hp - H), (0, Vp - V))).astype(compute_dtype)
    b_out = jnp.pad(params["b_out"], (0, Vp - V)).astype(
        jnp.float32).reshape(1, Vp)
    h0 = jnp.pad(hidden_state[0].astype(jnp.float32),
                 ((0, Bp - B), (0, Hp - H)))

    logits_pad, h_final_pad = rnn_fused_forward(
        xw, w_hh_t, w_out_t, b_out, h0, tb=tb, compute_dtype=compute_dtype)

    logits = logits_pad[:, :B, :V].reshape(T * B, V)
    h_final = h_final_pad[:B, :H]
    return logits, h_final[None, :, :]


def hidden_state_init(batch_size, hidden_size, num_directions=1, num_layers=1):
    return jnp.zeros((num_directions * num_layers, batch_size, hidden_size),
                     jnp.float32)


# ----------------------------------------------------------------------------
def init_params(key, vocab_size, hidden_size):
    ks = jax.random.split(key, 6)
    s = 0.1
    return {
        # nn.RNN parameters (single layer, unidirectional)
        "w_ih": s * jax.random.normal(ks[0], (hidden_size, vocab_size), jnp.float32),
        "w_hh": s * jax.random.normal(ks[1], (hidden_size, hidden_size), jnp.float32),
        "b_ih": s * jax.random.normal(ks[2], (hidden_size,), jnp.float32),
        "b_hh": s * jax.random.normal(ks[3], (hidden_size,), jnp.float32),
        # nn.Linear(hidden_size, vocab_size)
        "w_out": s * jax.random.normal(ks[4], (vocab_size, hidden_size), jnp.float32),
        "b_out": s * jax.random.normal(ks[5], (vocab_size,), jnp.float32),
    }


def reference_forward(params, x_tokens, hidden_state):
    vocab = params["w_ih"].shape[1]
    x = jax.nn.one_hot(x_tokens.T, vocab, dtype=jnp.float32)  # (T, B, V)
    h = hidden_state[0]
    ys = []
    for t in range(x.shape[0]):
        h = jnp.tanh(x[t] @ params["w_ih"].T + params["b_ih"]
                     + h @ params["w_hh"].T + params["b_hh"])
        ys.append(h)
    y = jnp.stack(ys, 0).reshape(-1, h.shape[-1])
    return y @ params["w_out"].T + params["b_out"], h[None]


if __name__ == "__main__":
    key = jax.random.PRNGKey(0)
    batch, seq, vocab, hidden = 2, 8, 32, 32

    kp, kx = jax.random.split(key)
    params = init_params(kp, vocab, hidden)
    x_tokens = jax.random.randint(kx, (batch, seq), 0, vocab, dtype=jnp.int32)
    h0 = hidden_state_init(batch, hidden)

    ref_logits, ref_h = reference_forward(params, x_tokens, h0)

    # 1) f32 compute, whole sequence in one grid step -> strict match.
    logits, h_out = rnn_module_forward(params, x_tokens, h0,
                                       compute_dtype=jnp.float32)
    logits = jax.block_until_ready(logits)
    h_out = jax.block_until_ready(h_out)
    assert logits.shape == (seq * batch, vocab)
    assert h_out.shape == (1, batch, hidden)
    assert jnp.allclose(logits, ref_logits, atol=1e-5, rtol=1e-5)
    assert jnp.allclose(h_out, ref_h, atol=1e-5, rtol=1e-5)

    # 2) f32 compute, 2 grid steps (exercises hidden-state carry in scratch).
    logits2, h_out2 = rnn_module_forward(params, x_tokens, h0,
                                         compute_dtype=jnp.float32,
                                         time_block=4)
    logits2 = jax.block_until_ready(logits2)
    h_out2 = jax.block_until_ready(h_out2)
    assert jnp.allclose(logits2, ref_logits, atol=1e-5, rtol=1e-5)
    assert jnp.allclose(h_out2, ref_h, atol=1e-5, rtol=1e-5)

    # 3) bf16 weights (f32 accumulation) -> loose match.
    logits_bf, h_out_bf = rnn_module_forward(params, x_tokens, h0,
                                             compute_dtype=jnp.bfloat16)
    logits_bf = jax.block_until_ready(logits_bf)
    h_out_bf = jax.block_until_ready(h_out_bf)
    assert jnp.allclose(logits_bf, ref_logits, atol=3e-2, rtol=3e-2)
    assert jnp.allclose(h_out_bf, ref_h, atol=3e-2, rtol=3e-2)

    print("KERNEL_OK")
</pallas_src>

<mosaic_0001>
module attributes {stable_mosaic.version = 11 : i64} {
  func.func @fused_rnn_kernel(%arg0: i32, %arg1: memref<8x8x128xf32, #tpu.memory_space<vmem>>, %arg2: memref<128x128xf32, #tpu.memory_space<vmem>>, %arg3: memref<128x128xf32, #tpu.memory_space<vmem>>, %arg4: memref<1x128xf32, #tpu.memory_space<vmem>>, %arg5: memref<8x128xf32, #tpu.memory_space<vmem>>, %arg6: memref<8x8x128xf32, #tpu.memory_space<vmem>>, %arg7: memref<8x128xf32, #tpu.memory_space<vmem>>, %arg8: memref<8x128xf32, #tpu.memory_space<vmem>>) attributes {dimension_semantics = [#tpu.dimension_semantics<arbitrary>], iteration_bounds = array<i64: 1>, scalar_prefetch = 0 : i64, scratch_operands = 1 : i64, tpu.core_type = #tpu.core_type<tc>, window_params = [{transform_indices = @transform_0, window_bounds = array<i64: 8, 8, 128>}, {pipeline_mode = #tpu.pipeline_mode<synchronous>, transform_indices = @transform_1, window_bounds = array<i64: 128, 128>}, {pipeline_mode = #tpu.pipeline_mode<synchronous>, transform_indices = @transform_2, window_bounds = array<i64: 128, 128>}, {pipeline_mode = #tpu.pipeline_mode<synchronous>, transform_indices = @transform_3, window_bounds = array<i64: 1, 128>}, {pipeline_mode = #tpu.pipeline_mode<synchronous>, transform_indices = @transform_4, window_bounds = array<i64: 8, 128>}, {transform_indices = @transform_5, window_bounds = array<i64: 8, 8, 128>}, {pipeline_mode = #tpu.pipeline_mode<synchronous>, transform_indices = @transform_6, window_bounds = array<i64: 8, 128>}]} {
    %c0_i32 = arith.constant 0 : i32
    %0 = arith.cmpi eq, %arg0, %c0_i32 : i32
    %1 = arith.extui %0 : i1 to i32
    %c0_i32_0 = arith.constant 0 : i32
    %2 = arith.cmpi ne, %1, %c0_i32_0 : i32
    scf.if %2 {
      %c0_60 = arith.constant 0 : index
      %c0_61 = arith.constant 0 : index
      %115 = vector.load %arg5[%c0_60, %c0_61] : memref<8x128xf32, #tpu.memory_space<vmem>>, vector<8x128xf32>
      %c0_62 = arith.constant 0 : index
      %c0_63 = arith.constant 0 : index
      %116 = vector.load %arg8[%c0_62, %c0_63] : memref<8x128xf32, #tpu.memory_space<vmem>>, vector<8x128xf32>
      tpu.vector_store %arg8[%c0_62, %c0_63], %115 {strides = array<i32>} : memref<8x128xf32, #tpu.memory_space<vmem>>, vector<8x128xf32>,
    } else {
    }
    %c0 = arith.constant 0 : index
    %c0_1 = arith.constant 0 : index
    %3 = vector.load %arg2[%c0, %c0_1] : memref<128x128xf32, #tpu.memory_space<vmem>>, vector<128x128xf32>
    %c0_2 = arith.constant 0 : index
    %c0_3 = arith.constant 0 : index
    %4 = vector.load %arg3[%c0_2, %c0_3] : memref<128x128xf32, #tpu.memory_space<vmem>>, vector<128x128xf32>
    %c0_4 = arith.constant 0 : index
    %c0_5 = arith.constant 0 : index
    %5 = vector.load %arg4[%c0_4, %c0_5] : memref<1x128xf32, #tpu.memory_space<vmem>>, vector<1x128xf32>
    %c0_6 = arith.constant 0 : index
    %c0_7 = arith.constant 0 : index
    %6 = vector.load %arg8[%c0_6, %c0_7] : memref<8x128xf32, #tpu.memory_space<vmem>>, vector<8x128xf32>
    %c0_i32_8 = arith.constant 0 : i32
    %7 = arith.index_cast %c0_i32_8 : i32 to index
    %c0_9 = arith.constant 0 : index
    %c0_10 = arith.constant 0 : index
    %8 = vector.load %arg1[%7, %c0_9, %c0_10] : memref<8x8x128xf32, #tpu.memory_space<vmem>>, vector<1x8x128xf32>
    %9 = vector.shape_cast %8 : vector<1x8x128xf32> to vector<8x128xf32>
    %cst = arith.constant dense<0.000000e+00> : vector<8x128xf32>
    %10 = tpu.matmul %6, %3, %cst {dimension_numbers = #tpu.dot_dimension_numbers<[1], [0], [0], [1], [0, 0, 1, 1], [], []>} : vector<8x128xf32>, vector<128x128xf32>, vector<8x128xf32> -> vector<8x128xf32>
    %11 = arith.addf %9, %10 : vector<8x128xf32>
    %12 = math.tanh %11 : vector<8x128xf32>
    %cst_11 = arith.constant dense<0.000000e+00> : vector<8x128xf32>
    %13 = tpu.matmul %12, %4, %cst_11 {dimension_numbers = #tpu.dot_dimension_numbers<[1], [0], [0], [1], [0, 0, 1, 1], [], []>} : vector<8x128xf32>, vector<128x128xf32>, vector<8x128xf32> -> vector<8x128xf32>
    %14 = vector.broadcast %5 : vector<1x128xf32> to vector<8x128xf32>
    %15 = arith.addf %13, %14 : vector<8x128xf32>
    %16 = arith.index_cast %c0_i32_8 : i32 to index
    %c0_12 = arith.constant 0 : index
    %c0_13 = arith.constant 0 : index
    %17 = vector.load %arg6[%16, %c0_12, %c0_13] : memref<8x8x128xf32, #tpu.memory_space<vmem>>, vector<1x8x128xf32>
    %18 = vector.shape_cast %17 : vector<1x8x128xf32> to vector<8x128xf32>
    %19 = vector.shape_cast %15 : vector<8x128xf32> to vector<1x8x128xf32>
    tpu.vector_store %arg6[%16, %c0_12, %c0_13], %19 {strides = array<i32>} : memref<8x8x128xf32, #tpu.memory_space<vmem>>, vector<1x8x128xf32>,
    %c1_i32 = arith.constant 1 : i32
    %20 = arith.index_cast %c1_i32 : i32 to index
    %c0_14 = arith.constant 0 : index
    %c0_15 = arith.constant 0 : index
    %21 = vector.load %arg1[%20, %c0_14, %c0_15] : memref<8x8x128xf32, #tpu.memory_space<vmem>>, vector<1x8x128xf32>
    %22 = vector.shape_cast %21 : vector<1x8x128xf32> to vector<8x128xf32>
    %cst_16 = arith.constant dense<0.000000e+00> : vector<8x128xf32>
    %23 = tpu.matmul %12, %3, %cst_16 {dimension_numbers = #tpu.dot_dimension_numbers<[1], [0], [0], [1], [0, 0, 1, 1], [], []>} : vector<8x128xf32>, vector<128x128xf32>, vector<8x128xf32> -> vector<8x128xf32>
    %24 = arith.addf %22, %23 : vector<8x128xf32>
    %25 = math.tanh %24 : vector<8x128xf32>
    %cst_17 = arith.constant dense<0.000000e+00> : vector<8x128xf32>
    %26 = tpu.matmul %25, %4, %cst_17 {dimension_numbers = #tpu.dot_dimension_numbers<[1], [0], [0], [1], [0, 0, 1, 1], [], []>} : vector<8x128xf32>, vector<128x128xf32>, vector<8x128xf32> -> vector<8x128xf32>
    %27 = vector.broadcast %5 : vector<1x128xf32> to vector<8x128xf32>
    %28 = arith.addf %26, %27 : vector<8x128xf32>
    %29 = arith.index_cast %c1_i32 : i32 to index
    %c0_18 = arith.constant 0 : index
    %c0_19 = arith.constant 0 : index
    %30 = vector.load %arg6[%29, %c0_18, %c0_19] : memref<8x8x128xf32, #tpu.memory_space<vmem>>, vector<1x8x128xf32>
    %31 = vector.shape_cast %30 : vector<1x8x128xf32> to vector<8x128xf32>
    %32 = vector.shape_cast %28 : vector<8x128xf32> to vector<1x8x128xf32>
    tpu.vector_store %arg6[%29, %c0_18, %c0_19], %32 {strides = array<i32>} : memref<8x8x128xf32, #tpu.memory_space<vmem>>, vector<1x8x128xf32>,
    %c2_i32 = arith.constant 2 : i32
    %33 = arith.index_cast %c2_i32 : i32 to index
    %c0_20 = arith.constant 0 : index
    %c0_21 = arith.constant 0 : index
    %34 = vector.load %arg1[%33, %c0_20, %c0_21] : memref<8x8x128xf32, #tpu.memory_space<vmem>>, vector<1x8x128xf32>
    %35 = vector.shape_cast %34 : vector<1x8x128xf32> to vector<8x128xf32>
    %cst_22 = arith.constant dense<0.000000e+00> : vector<8x128xf32>
    %36 = tpu.matmul %25, %3, %cst_22 {dimension_numbers = #tpu.dot_dimension_numbers<[1], [0], [0], [1], [0, 0, 1, 1], [], []>} : vector<8x128xf32>, vector<128x128xf32>, vector<8x128xf32> -> vector<8x128xf32>
    %37 = arith.addf %35, %36 : vector<8x128xf32>
    %38 = math.tanh %37 : vector<8x128xf32>
    %cst_23 = arith.constant dense<0.000000e+00> : vector<8x128xf32>
    %39 = tpu.matmul %38, %4, %cst_23 {dimension_numbers = #tpu.dot_dimension_numbers<[1], [0], [0], [1], [0, 0, 1, 1], [], []>} : vector<8x128xf32>, vector<128x128xf32>, vector<8x128xf32> -> vector<8x128xf32>
    %40 = vector.broadcast %5 : vector<1x128xf32> to vector<8x128xf32>
    %41 = arith.addf %39, %40 : vector<8x128xf32>
    %42 = arith.index_cast %c2_i32 : i32 to index
    %c0_24 = arith.constant 0 : index
    %c0_25 = arith.constant 0 : index
    %43 = vector.load %arg6[%42, %c0_24, %c0_25] : memref<8x8x128xf32, #tpu.memory_space<vmem>>, vector<1x8x128xf32>
    %44 = vector.shape_cast %43 : vector<1x8x128xf32> to vector<8x128xf32>
    %45 = vector.shape_cast %41 : vector<8x128xf32> to vector<1x8x128xf32>
    tpu.vector_store %arg6[%42, %c0_24, %c0_25], %45 {strides = array<i32>} : memref<8x8x128xf32, #tpu.memory_space<vmem>>, vector<1x8x128xf32>,
    %c3_i32 = arith.constant 3 : i32
    %46 = arith.index_cast %c3_i32 : i32 to index
    %c0_26 = arith.constant 0 : index
    %c0_27 = arith.constant 0 : index
    %47 = vector.load %arg1[%46, %c0_26, %c0_27] : memref<8x8x128xf32, #tpu.memory_space<vmem>>, vector<1x8x128xf32>
    %48 = vector.shape_cast %47 : vector<1x8x128xf32> to vector<8x128xf32>
    %cst_28 = arith.constant dense<0.000000e+00> : vector<8x128xf32>
    %49 = tpu.matmul %38, %3, %cst_28 {dimension_numbers = #tpu.dot_dimension_numbers<[1], [0], [0], [1], [0, 0, 1, 1], [], []>} : vector<8x128xf32>, vector<128x128xf32>, vector<8x128xf32> -> vector<8x128xf32>
    %50 = arith.addf %48, %49 : vector<8x128xf32>
    %51 = math.tanh %50 : vector<8x128xf32>
    %cst_29 = arith.constant dense<0.000000e+00> : vector<8x128xf32>
    %52 = tpu.matmul %51, %4, %cst_29 {dimension_numbers = #tpu.dot_dimension_numbers<[1], [0], [0], [1], [0, 0, 1, 1], [], []>} : vector<8x128xf32>, vector<128x128xf32>, vector<8x128xf32> -> vector<8x128xf32>
    %53 = vector.broadcast %5 : vector<1x128xf32> to vector<8x128xf32>
    %54 = arith.addf %52, %53 : vector<8x128xf32>
    %55 = arith.index_cast %c3_i32 : i32 to index
    %c0_30 = arith.constant 0 : index
    %c0_31 = arith.constant 0 : index
    %56 = vector.load %arg6[%55, %c0_30, %c0_31] : memref<8x8x128xf32, #tpu.memory_space<vmem>>, vector<1x8x128xf32>
    %57 = vector.shape_cast %56 : vector<1x8x128xf32> to vector<8x128xf32>
    %58 = vector.shape_cast %54 : vector<8x128xf32> to vector<1x8x128xf32>
    tpu.vector_store %arg6[%55, %c0_30, %c0_31], %58 {strides = array<i32>} : memref<8x8x128xf32, #tpu.memory_space<vmem>>, vector<1x8x128xf32>,
    %c4_i32 = arith.constant 4 : i32
    %59 = arith.index_cast %c4_i32 : i32 to index
    %c0_32 = arith.constant 0 : index
    %c0_33 = arith.constant 0 : index
    %60 = vector.load %arg1[%59, %c0_32, %c0_33] : memref<8x8x128xf32, #tpu.memory_space<vmem>>, vector<1x8x128xf32>
    %61 = vector.shape_cast %60 : vector<1x8x128xf32> to vector<8x128xf32>
    %cst_34 = arith.constant dense<0.000000e+00> : vector<8x128xf32>
    %62 = tpu.matmul %51, %3, %cst_34 {dimension_numbers = #tpu.dot_dimension_numbers<[1], [0], [0], [1], [0, 0, 1, 1], [], []>} : vector<8x128xf32>, vector<128x128xf32>, vector<8x128xf32> -> vector<8x128xf32>
    %63 = arith.addf %61, %62 : vector<8x128xf32>
    %64 = math.tanh %63 : vector<8x128xf32>
    %cst_35 = arith.constant dense<0.000000e+00> : vector<8x128xf32>
    %65 = tpu.matmul %64, %4, %cst_35 {dimension_numbers = #tpu.dot_dimension_numbers<[1], [0], [0], [1], [0, 0, 1, 1], [], []>} : vector<8x128xf32>, vector<128x128xf32>, vector<8x128xf32> -> vector<8x128xf32>
    %66 = vector.broadcast %5 : vector<1x128xf32> to vector<8x128xf32>
    %67 = arith.addf %65, %66 : vector<8x128xf32>
    %68 = arith.index_cast %c4_i32 : i32 to index
    %c0_36 = arith.constant 0 : index
    %c0_37 = arith.constant 0 : index
    %69 = vector.load %arg6[%68, %c0_36, %c0_37] : memref<8x8x128xf32, #tpu.memory_space<vmem>>, vector<1x8x128xf32>
    %70 = vector.shape_cast %69 : vector<1x8x128xf32> to vector<8x128xf32>
    %71 = vector.shape_cast %67 : vector<8x128xf32> to vector<1x8x128xf32>
    tpu.vector_store %arg6[%68, %c0_36, %c0_37], %71 {strides = array<i32>} : memref<8x8x128xf32, #tpu.memory_space<vmem>>, vector<1x8x128xf32>,
    %c5_i32 = arith.constant 5 : i32
    %72 = arith.index_cast %c5_i32 : i32 to index
    %c0_38 = arith.constant 0 : index
    %c0_39 = arith.constant 0 : index
    %73 = vector.load %arg1[%72, %c0_38, %c0_39] : memref<8x8x128xf32, #tpu.memory_space<vmem>>, vector<1x8x128xf32>
    %74 = vector.shape_cast %73 : vector<1x8x128xf32> to vector<8x128xf32>
    %cst_40 = arith.constant dense<0.000000e+00> : vector<8x128xf32>
    %75 = tpu.matmul %64, %3, %cst_40 {dimension_numbers = #tpu.dot_dimension_numbers<[1], [0], [0], [1], [0, 0, 1, 1], [], []>} : vector<8x128xf32>, vector<128x128xf32>, vector<8x128xf32> -> vector<8x128xf32>
    %76 = arith.addf %74, %75 : vector<8x128xf32>
    %77 = math.tanh %76 : vector<8x128xf32>
    %cst_41 = arith.constant dense<0.000000e+00> : vector<8x128xf32>
    %78 = tpu.matmul %77, %4, %cst_41 {dimension_numbers = #tpu.dot_dimension_numbers<[1], [0], [0], [1], [0, 0, 1, 1], [], []>} : vector<8x128xf32>, vector<128x128xf32>, vector<8x128xf32> -> vector<8x128xf32>
    %79 = vector.broadcast %5 : vector<1x128xf32> to vector<8x128xf32>
    %80 = arith.addf %78, %79 : vector<8x128xf32>
    %81 = arith.index_cast %c5_i32 : i32 to index
    %c0_42 = arith.constant 0 : index
    %c0_43 = arith.constant 0 : index
    %82 = vector.load %arg6[%81, %c0_42, %c0_43] : memref<8x8x128xf32, #tpu.memory_space<vmem>>, vector<1x8x128xf32>
    %83 = vector.shape_cast %82 : vector<1x8x128xf32> to vector<8x128xf32>
    %84 = vector.shape_cast %80 : vector<8x128xf32> to vector<1x8x128xf32>
    tpu.vector_store %arg6[%81, %c0_42, %c0_43], %84 {strides = array<i32>} : memref<8x8x128xf32, #tpu.memory_space<vmem>>, vector<1x8x128xf32>,
    %c6_i32 = arith.constant 6 : i32
    %85 = arith.index_cast %c6_i32 : i32 to index
    %c0_44 = arith.constant 0 : index
    %c0_45 = arith.constant 0 : index
    %86 = vector.load %arg1[%85, %c0_44, %c0_45] : memref<8x8x128xf32, #tpu.memory_space<vmem>>, vector<1x8x128xf32>
    %87 = vector.shape_cast %86 : vector<1x8x128xf32> to vector<8x128xf32>
    %cst_46 = arith.constant dense<0.000000e+00> : vector<8x128xf32>
    %88 = tpu.matmul %77, %3, %cst_46 {dimension_numbers = #tpu.dot_dimension_numbers<[1], [0], [0], [1], [0, 0, 1, 1], [], []>} : vector<8x128xf32>, vector<128x128xf32>, vector<8x128xf32> -> vector<8x128xf32>
    %89 = arith.addf %87, %88 : vector<8x128xf32>
    %90 = math.tanh %89 : vector<8x128xf32>
    %cst_47 = arith.constant dense<0.000000e+00> : vector<8x128xf32>
    %91 = tpu.matmul %90, %4, %cst_47 {dimension_numbers = #tpu.dot_dimension_numbers<[1], [0], [0], [1], [0, 0, 1, 1], [], []>} : vector<8x128xf32>, vector<128x128xf32>, vector<8x128xf32> -> vector<8x128xf32>
    %92 = vector.broadcast %5 : vector<1x128xf32> to vector<8x128xf32>
    %93 = arith.addf %91, %92 : vector<8x128xf32>
    %94 = arith.index_cast %c6_i32 : i32 to index
    %c0_48 = arith.constant 0 : index
    %c0_49 = arith.constant 0 : index
    %95 = vector.load %arg6[%94, %c0_48, %c0_49] : memref<8x8x128xf32, #tpu.memory_space<vmem>>, vector<1x8x128xf32>
    %96 = vector.shape_cast %95 : vector<1x8x128xf32> to vector<8x128xf32>
    %97 = vector.shape_cast %93 : vector<8x128xf32> to vector<1x8x128xf32>
    tpu.vector_store %arg6[%94, %c0_48, %c0_49], %97 {strides = array<i32>} : memref<8x8x128xf32, #tpu.memory_space<vmem>>, vector<1x8x128xf32>,
    %c7_i32 = arith.constant 7 : i32
    %98 = arith.index_cast %c7_i32 : i32 to index
    %c0_50 = arith.constant 0 : index
    %c0_51 = arith.constant 0 : index
    %99 = vector.load %arg1[%98, %c0_50, %c0_51] : memref<8x8x128xf32, #tpu.memory_space<vmem>>, vector<1x8x128xf32>
    %100 = vector.shape_cast %99 : vector<1x8x128xf32> to vector<8x128xf32>
    %cst_52 = arith.constant dense<0.000000e+00> : vector<8x128xf32>
    %101 = tpu.matmul %90, %3, %cst_52 {dimension_numbers = #tpu.dot_dimension_numbers<[1], [0], [0], [1], [0, 0, 1, 1], [], []>} : vector<8x128xf32>, vector<128x128xf32>, vector<8x128xf32> -> vector<8x128xf32>
    %102 = arith.addf %100, %101 : vector<8x128xf32>
    %103 = math.tanh %102 : vector<8x128xf32>
    %cst_53 = arith.constant dense<0.000000e+00> : vector<8x128xf32>
    %104 = tpu.matmul %103, %4, %cst_53 {dimension_numbers = #tpu.dot_dimension_numbers<[1], [0], [0], [1], [0, 0, 1, 1], [], []>} : vector<8x128xf32>, vector<128x128xf32>, vector<8x128xf32> -> vector<8x128xf32>
    %105 = vector.broadcast %5 : vector<1x128xf32> to vector<8x128xf32>
    %106 = arith.addf %104, %105 : vector<8x128xf32>
    %107 = arith.index_cast %c7_i32 : i32 to index
    %c0_54 = arith.constant 0 : index
    %c0_55 = arith.constant 0 : index
    %108 = vector.load %arg6[%107, %c0_54, %c0_55] : memref<8x8x128xf32, #tpu.memory_space<vmem>>, vector<1x8x128xf32>
    %109 = vector.shape_cast %108 : vector<1x8x128xf32> to vector<8x128xf32>
    %110 = vector.shape_cast %106 : vector<8x128xf32> to vector<1x8x128xf32>
    tpu.vector_store %arg6[%107, %c0_54, %c0_55], %110 {strides = array<i32>} : memref<8x8x128xf32, #tpu.memory_space<vmem>>, vector<1x8x128xf32>,
    %c8_i32 = arith.constant 8 : i32
    %c0_56 = arith.constant 0 : index
    %c0_57 = arith.constant 0 : index
    %111 = vector.load %arg8[%c0_56, %c0_57] : memref<8x128xf32, #tpu.memory_space<vmem>>, vector<8x128xf32>
    tpu.vector_store %arg8[%c0_56, %c0_57], %103 {strides = array<i32>} : memref<8x128xf32, #tpu.memory_space<vmem>>, vector<8x128xf32>,
    %c0_i32_58 = arith.constant 0 : i32
    %112 = arith.cmpi eq, %arg0, %c0_i32_58 : i32
    %113 = arith.extui %112 : i1 to i32
    %c0_i32_59 = arith.constant 0 : i32
    %114 = arith.cmpi ne, %113, %c0_i32_59 : i32
    scf.if %114 {
      %c0_60 = arith.constant 0 : index
      %c0_61 = arith.constant 0 : index
      %115 = vector.load %arg7[%c0_60, %c0_61] : memref<8x128xf32, #tpu.memory_space<vmem>>, vector<8x128xf32>
      tpu.vector_store %arg7[%c0_60, %c0_61], %103 {strides = array<i32>} : memref<8x128xf32, #tpu.memory_space<vmem>>, vector<8x128xf32>,
    } else {
    }
    return
  }
  func.func @transform_0(%arg0: i32) -> (i32, i32, i32) {
    %c0_i32 = arith.constant 0 : i32
    %c0_i32_0 = arith.constant 0 : i32
    %c0_i32_1 = arith.constant 0 : i32
    return %arg0, %c0_i32, %c0_i32_0 : i32, i32, i32
  }
  func.func @transform_1(%arg0: i32) -> (i32, i32) {
    %c0_i32 = arith.constant 0 : i32
    %c0_i32_0 = arith.constant 0 : i32
    %c0_i32_1 = arith.constant 0 : i32
    return %c0_i32, %c0_i32_0 : i32, i32
  }
  func.func @transform_2(%arg0: i32) -> (i32, i32) {
    %c0_i32 = arith.constant 0 : i32
    %c0_i32_0 = arith.constant 0 : i32
    %c0_i32_1 = arith.constant 0 : i32
    return %c0_i32, %c0_i32_0 : i32, i32
  }
  func.func @transform_3(%arg0: i32) -> (i32, i32) {
    %c0_i32 = arith.constant 0 : i32
    %c0_i32_0 = arith.constant 0 : i32
    %c0_i32_1 = arith.constant 0 : i32
    return %c0_i32, %c0_i32_0 : i32, i32
  }
  func.func @transform_4(%arg0: i32) -> (i32, i32) {
    %c0_i32 = arith.constant 0 : i32
    %c0_i32_0 = arith.constant 0 : i32
    %c0_i32_1 = arith.constant 0 : i32
    return %c0_i32, %c0_i32_0 : i32, i32
  }
  func.func @transform_5(%arg0: i32) -> (i32, i32, i32) {
    %c0_i32 = arith.constant 0 : i32
    %c0_i32_0 = arith.constant 0 : i32
    %c0_i32_1 = arith.constant 0 : i32
    return %arg0, %c0_i32, %c0_i32_0 : i32, i32, i32
  }
  func.func @transform_6(%arg0: i32) -> (i32, i32) {
    %c0_i32 = arith.constant 0 : i32
    %c0_i32_0 = arith.constant 0 : i32
    %c0_i32_1 = arith.constant 0 : i32
    return %c0_i32, %c0_i32_0 : i32, i32
  }
}

</mosaic_0001>

<llo_original>
// kernel: tpu_custom_call.1
$region0: #{tpu_custom_call.1}
  #allocation0 [shape = 'u32[]', space=smem, size = 0x4, offset = 0x4, fixed_abs, tag = 'smem constant byte address 0x4 - core index']
  #allocation1 [shape = 'u32[144,128]{1,0:T(1,128)}', space=vmem, size = 0x12000, scoped, tag = 'internal scratch']
  #allocation2 [shape = 'f32[8,128]{1,0:T(8,128)}', space=vmem, size = 0x1000, scoped, tag = 'scratch operand']
  %s0 = inlined_call_operand.hbm [shape: f32[8,8,128], index: 0, kind: input, shape index: {}]
  %s1 = inlined_call_operand.hbm [shape: f32[128,128], index: 1, kind: input, shape index: {}]
  %s2 = inlined_call_operand.hbm [shape: f32[128,128], index: 2, kind: input, shape index: {}]
  %s3 = inlined_call_operand.vmem [shape: f32[1,128], index: 3, kind: input, shape index: {}]
  %s4 = inlined_call_operand.vmem [shape: f32[8,128], index: 4, kind: input, shape index: {}]
  %s5 = inlined_call_operand.hbm [shape: f32[8,8,128], index: 5, kind: output, shape index: {0}]
  %s6 = inlined_call_operand.hbm [shape: f32[8,128], index: 6, kind: output, shape index: {1}]
  %7 = xla_tuple %s5, %s6
  %s8 = sld [smem:[#allocation0]]
  $region58: #{tpu_custom_call.1} parent=0
    _
  %s10 = ssub.s32 1, %s8
  %s11 = scalar_select 0, %s10, %s8
  $region1: #{tpu_custom_call.1} parent=0
    #allocation3 [shape = 'u8[32768]{0}', space=vmem, size = 0x8000, scoped, tag = 'input window, operand 0, single buffered']
    #allocation4 [shape = 's32[1]{0}', space=sflag, size = 0x4, scoped, tag = 'scoped memory for tpu_custom_call.1']
    #allocation5 [shape = 's32[1]{0}', space=sflag, size = 0x4, scoped, tag = 'scoped memory for tpu_custom_call.1']
    #allocation6 [shape = 'u8[65536]{0}', space=vmem, size = 0x10000, scoped, tag = 'input window, operand 1, single buffered']
    #allocation7 [shape = 's32[1]{0}', space=sflag, size = 0x4, scoped, tag = 'scoped memory for tpu_custom_call.1']
    #allocation8 [shape = 'u8[65536]{0}', space=vmem, size = 0x10000, scoped, tag = 'input window, operand 2, single buffered']
    #allocation9 [shape = 'u8[32768]{0}', space=vmem, size = 0x8000, scoped, tag = 'output window, operand 0, single buffered']
    #allocation10 [shape = 'u8[4096]{0}', space=vmem, size = 0x1000, scoped, tag = 'output window, operand 1, single buffered']
    #allocation11 [shape = 's32[1]{0}', space=sflag, size = 0x4, scoped, tag = 'scoped memory for tpu_custom_call.1']
    %12 = vsyncpa [#allocation4], 0
    %13 = vsyncpa [#allocation7], 0
    %14 = vsyncpa [#allocation5], 0
    %15 = vsyncpa [#allocation11], 0
    // Predicated region
    $region2: #{tpu_custom_call.1} parent=1 // pred_check
      _
    $region3: #{tpu_custom_call.1} parent=1 // pred_check_branch
      %17 = sbr.rel (0) target = $region5
    $region4: #{tpu_custom_call.1} parent=1 // pred_region
      %s19 = ssub.s32 1024, 1024
      %20 = vsyncadd [#allocation4], %s19
      %s21 = sshll.u32 [#allocation3], 4
      %s22 = int_to_ptr.vmem [resolvable:$true] %s21
      %27 = dma.hbm_to_vmem [thread:$0]  %s0, 1024, %s22, [#allocation4], 128, 128, 8
    $region5: #{tpu_custom_call.1} parent=1 // pred_fallthru
      _
    // Predicated region
    $region6: #{tpu_custom_call.1} parent=1 // pred_check
      _
    $region7: #{tpu_custom_call.1} parent=1 // pred_check_branch
      %29 = sbr.rel (0) target = $region9
    $region8: #{tpu_custom_call.1} parent=1 // pred_region
      %s31 = ssub.s32 2048, 2048
      %32 = vsyncadd [#allocation7], %s31
      %s33 = sshll.u32 [#allocation6], 4
      %s34 = int_to_ptr.vmem [resolvable:$true] %s33
      %39 = dma.hbm_to_vmem [thread:$0]  %s1, 2048, %s34, [#allocation7], 128, 128, 8
    $region9: #{tpu_custom_call.1} parent=1 // pred_fallthru
      _
    // Predicated region
    $region10: #{tpu_custom_call.1} parent=1 // pred_check
      _
    $region11: #{tpu_custom_call.1} parent=1 // pred_check_branch
      %41 = sbr.rel (0) target = $region13
    $region12: #{tpu_custom_call.1} parent=1 // pred_region
      %s43 = ssub.s32 2048, 2048
      %44 = vsyncadd [#allocation7], %s43
      %s45 = sshll.u32 [#allocation8], 4
      %s46 = int_to_ptr.vmem [resolvable:$true] %s45
      %51 = dma.hbm_to_vmem [thread:$0]  %s2, 2048, %s46, [#allocation7], 128, 128, 8
    $region13: #{tpu_custom_call.1} parent=1 // pred_fallthru
      _
    // Predicated region
    $region14: #{tpu_custom_call.1} parent=1 // pred_check
      _
    $region15: #{tpu_custom_call.1} parent=1 // pred_check_branch
      %53 = sbr.rel (0) target = $region17
    $region16: #{tpu_custom_call.1} parent=1 // pred_region
      _
    $region17: #{tpu_custom_call.1} parent=1 // pred_fallthru
      _
    // Predicated region
    $region18: #{tpu_custom_call.1} parent=1 // pred_check
      _
    $region19: #{tpu_custom_call.1} parent=1 // pred_check_branch
      %55 = sbr.rel (0) target = $region21
    $region20: #{tpu_custom_call.1} parent=1 // pred_region
      _
    $region21: #{tpu_custom_call.1} parent=1 // pred_fallthru
      _
    // Predicated region
    $region22: #{tpu_custom_call.1} parent=1 // pred_check
      _
    $region23: #{tpu_custom_call.1} parent=1 // pred_check_branch
      %57 = sbr.rel (0) target = $region25
    $region24: #{tpu_custom_call.1} parent=1 // pred_region
      %58 = dma.done [#allocation4], 1024
    $region25: #{tpu_custom_call.1} parent=1 // pred_fallthru
      _
    // Predicated region
    $region26: #{tpu_custom_call.1} parent=1 // pred_check
      _
    $region27: #{tpu_custom_call.1} parent=1 // pred_check_branch
      %60 = sbr.rel (0) target = $region29
    $region28: #{tpu_custom_call.1} parent=1 // pred_region
      %61 = dma.done [#allocation7], 2048
    $region29: #{tpu_custom_call.1} parent=1 // pred_fallthru
      _
    // Predicated region
    $region30: #{tpu_custom_call.1} parent=1 // pred_check
      _
    $region31: #{tpu_custom_call.1} parent=1 // pred_check_branch
      %63 = sbr.rel (0) target = $region33
    $region32: #{tpu_custom_call.1} parent=1 // pred_region
      %64 = dma.done [#allocation7], 2048
    $region33: #{tpu_custom_call.1} parent=1 // pred_fallthru
      _
    %p65 = scmp.eq.s32.totalorder 0, 0
    // Predicated region
    $region34: #{tpu_custom_call.1} parent=1 // pred_check
      %p66 = pneg %p65
    $region35: #{tpu_custom_call.1} parent=1 // pred_check_branch
      %68 = sbr.rel (%p66) target = $region37
    $region36: #{tpu_custom_call.1} parent=1 // pred_region
      %v69 = vld [vmem:[%s4] sm:$0xff]
      %70 = vst [vmem:[#allocation2] sm:$0xff] %v69
    $region37: #{tpu_custom_call.1} parent=1 // pred_fallthru
      _
    %v71 = vld [vmem:[#allocation6] sm:$0xff]
    %v72 = vld [vmem:[#allocation6 + $0x8] sm:$0xff]
    %v73 = vld [vmem:[#allocation6 + $0x10] sm:$0xff]
    %v74 = vld [vmem:[#allocation6 + $0x18] sm:$0xff]
    %v75 = vld [vmem:[#allocation6 + $0x20] sm:$0xff]
    %v76 = vld [vmem:[#allocation6 + $0x28] sm:$0xff]
    %v77 = vld [vmem:[#allocation6 + $0x30] sm:$0xff]
    %v78 = vld [vmem:[#allocation6 + $0x38] sm:$0xff]
    %v79 = vld [vmem:[#allocation6 + $0x40] sm:$0xff]
    %v80 = vld [vmem:[#allocation6 + $0x48] sm:$0xff]
    %v81 = vld [vmem:[#allocation6 + $0x50] sm:$0xff]
    %v82 = vld [vmem:[#allocation6 + $0x58] sm:$0xff]
    %v83 = vld [vmem:[#allocation6 + $0x60] sm:$0xff]
    %v84 = vld [vmem:[#allocation6 + $0x68] sm:$0xff]
    %v85 = vld [vmem:[#allocation6 + $0x70] sm:$0xff]
    %v86 = vld [vmem:[#allocation6 + $0x78] sm:$0xff]
    %v87 = vld [vmem:[#allocation8] sm:$0xff]
    %v88 = vld [vmem:[#allocation8 + $0x8] sm:$0xff]
    %v89 = vld [vmem:[#allocation8 + $0x10] sm:$0xff]
    %v90 = vld [vmem:[#allocation8 + $0x18] sm:$0xff]
    %v91 = vld [vmem:[#allocation8 + $0x20] sm:$0xff]
    %v92 = vld [vmem:[#allocation8 + $0x28] sm:$0xff]
    %v93 = vld [vmem:[#allocation8 + $0x30] sm:$0xff]
    %v94 = vld [vmem:[#allocation8 + $0x38] sm:$0xff]
    %v95 = vld [vmem:[#allocation8 + $0x40] sm:$0xff]
    %v96 = vld [vmem:[#allocation8 + $0x48] sm:$0xff]
    %v97 = vld [vmem:[#allocation8 + $0x50] sm:$0xff]
    %v98 = vld [vmem:[#allocation8 + $0x58] sm:$0xff]
    %v99 = vld [vmem:[#allocation8 + $0x60] sm:$0xff]
    %v100 = vld [vmem:[#allocation8 + $0x68] sm:$0xff]
    %v101 = vld [vmem:[#allocation8 + $0x70] sm:$0xff]
    %v102 = vld [vmem:[#allocation8 + $0x78] sm:$0xff]
    %v103 = vld [vmem:[%s3] sm:$0x1]
    %v104 = vld [vmem:[#allocation2] sm:$0xff]
    %v105 = vld [vmem:[#allocation3] sm:$0xff]
    %106 = vmatprep.subr.mxu0 0.0
    %107 = vmatpush1.msra.mxu0 %v71
    %108 = vmatprep.subr.mxu0 0.0
    %109 = vmatpush1.msra.mxu0 %v72
    %110 = vmatprep.subr.mxu0 0.0
    %111 = vmatpush1.msra.mxu0 %v73
    %112 = vmatprep.subr.mxu0 0.0
    %113 = vmatpush1.msra.mxu0 %v74
    %114 = vmatprep.subr.mxu0 0.0
    %115 = vmatpush1.msra.mxu0 %v75
    %116 = vmatprep.subr.mxu0 0.0
    %117 = vmatpush1.msra.mxu0 %v76
    %118 = vmatprep.subr.mxu0 0.0
    %119 = vmatpush1.msra.mxu0 %v77
    %120 = vmatprep.subr.mxu0 0.0
    %121 = vmatpush1.msra.mxu0 %v78
    %122 = vmatprep.subr.mxu0 0.0
    %123 = vmatpush1.msra.mxu0 %v79
    %124 = vmatprep.subr.mxu0 0.0
    %125 = vmatpush1.msra.mxu0 %v80
    %126 = vmatprep.subr.mxu0 0.0
    %127 = vmatpush1.msra.mxu0 %v81
    %128 = vmatprep.subr.mxu0 0.0
    %129 = vmatpush1.msra.mxu0 %v82
    %130 = vmatprep.subr.mxu0 0.0
    %131 = vmatpush1.msra.mxu0 %v83
    %132 = vmatprep.subr.mxu0 0.0
    %133 = vmatpush1.msra.mxu0 %v84
    %134 = vmatprep.subr.mxu0 0.0
    %135 = vmatpush1.msra.mxu0 %v85
    %136 = vmatprep.subr.mxu0 0.0
    %137 = vmatpush1.msra.mxu0 %v86
    %138 = vmatprep.subr.mxu0 0.0
    %139 = vmatpush1.msra.mxu0 0.0
    %140 = vmatprep.subr.mxu0 0.0
    %141 = vmatpush1.msra.mxu0 0.0
    %142 = vmatprep.subr.mxu0 0.0
    %143 = vmatpush1.msra.mxu0 0.0
    %144 = vmatprep.subr.mxu0 0.0
    %145 = vmatpush1.msra.mxu0 0.0
    %146 = vmatprep.subr.mxu0 0.0
    %147 = vmatpush1.msra.mxu0 0.0
    %148 = vmatprep.subr.mxu0 0.0
    %149 = vmatpush1.msra.mxu0 0.0
    %150 = vmatprep.subr.mxu0 0.0
    %151 = vmatpush1.msra.mxu0 0.0
    %152 = vmatprep.subr.mxu0 0.0
    %153 = vmatpush1.msra.mxu0 0.0
    %154 = vmatprep.subr.mxu0 0.0
    %155 = vmatpush1.msra.mxu0 0.0
    %156 = vmatprep.subr.mxu0 0.0
    %157 = vmatpush1.msra.mxu0 0.0
    %158 = vmatprep.subr.mxu0 0.0
    %159 = vmatpush1.msra.mxu0 0.0
    %160 = vmatprep.subr.mxu0 0.0
    %161 = vmatpush1.msra.mxu0 0.0
    %162 = vmatprep.subr.mxu0 0.0
    %163 = vmatpush1.msra.mxu0 0.0
    %164 = vmatprep.subr.mxu0 0.0
    %165 = vmatpush1.msra.mxu0 0.0
    %166 = vmatprep.subr.mxu0 0.0
    %167 = vmatpush1.msra.mxu0 0.0
    %168 = vmatprep.subr.mxu0 0.0
    %169 = vmatpush1.msra.mxu0 0.0
    %170 = vmatprep.mubr.f32.mxu0 0.0
    %171 = vmatmul.mubr.f32.gmra.mrb[0].mxu0 %v104
    %v172 = vpop.f32.mrb[0].mxu0
    %v173 = vadd.f32 0.0, %v172
    %v174 = vpop.f32.mrb[0].mxu0
    %175 = vdwg.mxu0
    %v176 = vadd.f32 %v105, %v173
    %v177 = vtanh.pop %v176
    %v179 = vlaneseq
    %v180 = vshrl.u32 %v179, 7
    %v181 = vsub.s32 0, %v180
    %v182 = vrot.slane %v103, %v181
    %184 = vmatprep.subr.mxu0 0.0
    %185 = vmatpush1.msra.mxu0 %v87
    %186 = vmatprep.subr.mxu0 0.0
    %187 = vmatpush1.msra.mxu0 %v88
    %188 = vmatprep.subr.mxu0 0.0
    %189 = vmatpush1.msra.mxu0 %v89
    %190 = vmatprep.subr.mxu0 0.0
    %191 = vmatpush1.msra.mxu0 %v90
    %192 = vmatprep.subr.mxu0 0.0
    %193 = vmatpush1.msra.mxu0 %v91
    %194 = vmatprep.subr.mxu0 0.0
    %195 = vmatpush1.msra.mxu0 %v92
    %196 = vmatprep.subr.mxu0 0.0
    %197 = vmatpush1.msra.mxu0 %v93
    %198 = vmatprep.subr.mxu0 0.0
    %199 = vmatpush1.msra.mxu0 %v94
    %200 = vmatprep.subr.mxu0 0.0
    %201 = vmatpush1.msra.mxu0 %v95
    %202 = vmatprep.subr.mxu0 0.0
    %203 = vmatpush1.msra.mxu0 %v96
    %204 = vmatprep.subr.mxu0 0.0
    %205 = vmatpush1.msra.mxu0 %v97
    %206 = vmatprep.subr.mxu0 0.0
    %207 = vmatpush1.msra.mxu0 %v98
    %208 = vmatprep.subr.mxu0 0.0
    %209 = vmatpush1.msra.mxu0 %v99
    %210 = vmatprep.subr.mxu0 0.0
    %211 = vmatpush1.msra.mxu0 %v100
    %212 = vmatprep.subr.mxu0 0.0
    %213 = vmatpush1.msra.mxu0 %v101
    %214 = vmatprep.subr.mxu0 0.0
    %215 = vmatpush1.msra.mxu0 %v102
    %216 = vmatprep.subr.mxu0 0.0
    %217 = vmatpush1.msra.mxu0 0.0
    %218 = vmatprep.subr.mxu0 0.0
    %219 = vmatpush1.msra.mxu0 0.0
    %220 = vmatprep.subr.mxu0 0.0
    %221 = vmatpush1.msra.mxu0 0.0
    %222 = vmatprep.subr.mxu0 0.0
    %223 = vmatpush1.msra.mxu0 0.0
    %224 = vmatprep.subr.mxu0 0.0
    %225 = vmatpush1.msra.mxu0 0.0
    %226 = vmatprep.subr.mxu0 0.0
    %227 = vmatpush1.msra.mxu0 0.0
    %228 = vmatprep.subr.mxu0 0.0
    %229 = vmatpush1.msra.mxu0 0.0
    %230 = vmatprep.subr.mxu0 0.0
    %231 = vmatpush1.msra.mxu0 0.0
    %232 = vmatprep.subr.mxu0 0.0
    %233 = vmatpush1.msra.mxu0 0.0
    %234 = vmatprep.subr.mxu0 0.0
    %235 = vmatpush1.msra.mxu0 0.0
    %236 = vmatprep.subr.mxu0 0.0
    %237 = vmatpush1.msra.mxu0 0.0
    %238 = vmatprep.subr.mxu0 0.0
    %239 = vmatpush1.msra.mxu0 0.0
    %240 = vmatprep.subr.mxu0 0.0
    %241 = vmatpush1.msra.mxu0 0.0
    %242 = vmatprep.subr.mxu0 0.0
    %243 = vmatpush1.msra.mxu0 0.0
    %244 = vmatprep.subr.mxu0 0.0
    %245 = vmatpush1.msra.mxu0 0.0
    %246 = vmatprep.subr.mxu0 0.0
    %247 = vmatpush1.msra.mxu0 0.0
    %248 = vmatprep.mubr.f32.mxu0 0.0
    %249 = vmatmul.mubr.f32.gmra.mrb[0].mxu0 %v177
    %v250 = vpop.f32.mrb[0].mxu0
    %v251 = vadd.f32 %v182, %v250
    %v252 = vpop.f32.mrb[0].mxu0
    %253 = vdwg.mxu0
    %254 = vst [vmem:[#allocation9] sm:$0xff] %v251
    %s255 = scalar_lea.vmem [#allocation3], 8
    %v256 = vld [vmem:[%s255] sm:$0xff]
    %257 = vmatprep.subr.mxu0 0.0
    %258 = vmatpush1.msra.mxu0 %v71
    %259 = vmatprep.subr.mxu0 0.0
    %260 = vmatpush1.msra.mxu0 %v72
    %261 = vmatprep.subr.mxu0 0.0
    %262 = vmatpush1.msra.mxu0 %v73
    %263 = vmatprep.subr.mxu0 0.0
    %264 = vmatpush1.msra.mxu0 %v74
    %265 = vmatprep.subr.mxu0 0.0
    %266 = vmatpush1.msra.mxu0 %v75
    %267 = vmatprep.subr.mxu0 0.0
    %268 = vmatpush1.msra.mxu0 %v76
    %269 = vmatprep.subr.mxu0 0.0
    %270 = vmatpush1.msra.mxu0 %v77
    %271 = vmatprep.subr.mxu0 0.0
    %272 = vmatpush1.msra.mxu0 %v78
    %273 = vmatprep.subr.mxu0 0.0
    %274 = vmatpush1.msra.mxu0 %v79
    %275 = vmatprep.subr.mxu0 0.0
    %276 = vmatpush1.msra.mxu0 %v80
    %277 = vmatprep.subr.mxu0 0.0
    %278 = vmatpush1.msra.mxu0 %v81
    %279 = vmatprep.subr.mxu0 0.0
    %280 = vmatpush1.msra.mxu0 %v82
    %281 = vmatprep.subr.mxu0 0.0
    %282 = vmatpush1.msra.mxu0 %v83
    %283 = vmatprep.subr.mxu0 0.0
    %284 = vmatpush1.msra.mxu0 %v84
    %285 = vmatprep.subr.mxu0 0.0
    %286 = vmatpush1.msra.mxu0 %v85
    %287 = vmatprep.subr.mxu0 0.0
    %288 = vmatpush1.msra.mxu0 %v86
    %289 = vmatprep.subr.mxu0 0.0
    %290 = vmatpush1.msra.mxu0 0.0
    %291 = vmatprep.subr.mxu0 0.0
    %292 = vmatpush1.msra.mxu0 0.0
    %293 = vmatprep.subr.mxu0 0.0
    %294 = vmatpush1.msra.mxu0 0.0
    %295 = vmatprep.subr.mxu0 0.0
    %296 = vmatpush1.msra.mxu0 0.0
    %297 = vmatprep.subr.mxu0 0.0
    %298 = vmatpush1.msra.mxu0 0.0
    %299 = vmatprep.subr.mxu0 0.0
    %300 = vmatpush1.msra.mxu0 0.0
    %301 = vmatprep.subr.mxu0 0.0
    %302 = vmatpush1.msra.mxu0 0.0
    %303 = vmatprep.subr.mxu0 0.0
    %304 = vmatpush1.msra.mxu0 0.0
    %305 = vmatprep.subr.mxu0 0.0
    %306 = vmatpush1.msra.mxu0 0.0
    %307 = vmatprep.subr.mxu0 0.0
    %308 = vmatpush1.msra.mxu0 0.0
    %309 = vmatprep.subr.mxu0 0.0
    %310 = vmatpush1.msra.mxu0 0.0
    %311 = vmatprep.subr.mxu0 0.0
    %312 = vmatpush1.msra.mxu0 0.0
    %313 = vmatprep.subr.mxu0 0.0
    %314 = vmatpush1.msra.mxu0 0.0
    %315 = vmatprep.subr.mxu0 0.0
    %316 = vmatpush1.msra.mxu0 0.0
    %317 = vmatprep.subr.mxu0 0.0
    %318 = vmatpush1.msra.mxu0 0.0
    %319 = vmatprep.subr.mxu0 0.0
    %320 = vmatpush1.msra.mxu0 0.0
    %321 = vmatprep.mubr.f32.mxu0 0.0
    %322 = vmatmul.mubr.f32.gmra.mrb[0].mxu0 %v177
    %v323 = vpop.f32.mrb[0].mxu0
    %v324 = vadd.f32 0.0, %v323
    %v325 = vpop.f32.mrb[0].mxu0
    %326 = vdwg.mxu0
    %v327 = vadd.f32 %v256, %v324
    %v328 = vtanh.pop %v327
    %329 = vmatprep.subr.mxu0 0.0
    %330 = vmatpush1.msra.mxu0 %v87
    %331 = vmatprep.subr.mxu0 0.0
    %332 = vmatpush1.msra.mxu0 %v88
    %333 = vmatprep.subr.mxu0 0.0
    %334 = vmatpush1.msra.mxu0 %v89
    %335 = vmatprep.subr.mxu0 0.0
    %336 = vmatpush1.msra.mxu0 %v90
    %337 = vmatprep.subr.mxu0 0.0
    %338 = vmatpush1.msra.mxu0 %v91
    %339 = vmatprep.subr.mxu0 0.0
    %340 = vmatpush1.msra.mxu0 %v92
    %341 = vmatprep.subr.mxu0 0.0
    %342 = vmatpush1.msra.mxu0 %v93
    %343 = vmatprep.subr.mxu0 0.0
    %344 = vmatpush1.msra.mxu0 %v94
    %345 = vmatprep.subr.mxu0 0.0
    %346 = vmatpush1.msra.mxu0 %v95
    %347 = vmatprep.subr.mxu0 0.0
    %348 = vmatpush1.msra.mxu0 %v96
    %349 = vmatprep.subr.mxu0 0.0
    %350 = vmatpush1.msra.mxu0 %v97
    %351 = vmatprep.subr.mxu0 0.0
    %352 = vmatpush1.msra.mxu0 %v98
    %353 = vmatprep.subr.mxu0 0.0
    %354 = vmatpush1.msra.mxu0 %v99
    %355 = vmatprep.subr.mxu0 0.0
    %356 = vmatpush1.msra.mxu0 %v100
    %357 = vmatprep.subr.mxu0 0.0
    %358 = vmatpush1.msra.mxu0 %v101
    %359 = vmatprep.subr.mxu0 0.0
    %360 = vmatpush1.msra.mxu0 %v102
    %361 = vmatprep.subr.mxu0 0.0
    %362 = vmatpush1.msra.mxu0 0.0
    %363 = vmatprep.subr.mxu0 0.0
    %364 = vmatpush1.msra.mxu0 0.0
    %365 = vmatprep.subr.mxu0 0.0
    %366 = vmatpush1.msra.mxu0 0.0
    %367 = vmatprep.subr.mxu0 0.0
    %368 = vmatpush1.msra.mxu0 0.0
    %369 = vmatprep.subr.mxu0 0.0
    %370 = vmatpush1.msra.mxu0 0.0
    %371 = vmatprep.subr.mxu0 0.0
    %372 = vmatpush1.msra.mxu0 0.0
    %373 = vmatprep.subr.mxu0 0.0
    %374 = vmatpush1.msra.mxu0 0.0
    %375 = vmatprep.subr.mxu0 0.0
    %376 = vmatpush1.msra.mxu0 0.0
    %377 = vmatprep.subr.mxu0 0.0
    %378 = vmatpush1.msra.mxu0 0.0
    %379 = vmatprep.subr.mxu0 0.0
    %380 = vmatpush1.msra.mxu0 0.0
    %381 = vmatprep.subr.mxu0 0.0
    %382 = vmatpush1.msra.mxu0 0.0
    %383 = vmatprep.subr.mxu0 0.0
    %384 = vmatpush1.msra.mxu0 0.0
    %385 = vmatprep.subr.mxu0 0.0
    %386 = vmatpush1.msra.mxu0 0.0
    %387 = vmatprep.subr.mxu0 0.0
    %388 = vmatpush1.msra.mxu0 0.0
    %389 = vmatprep.subr.mxu0 0.0
    %390 = vmatpush1.msra.mxu0 0.0
    %391 = vmatprep.subr.mxu0 0.0
    %392 = vmatpush1.msra.mxu0 0.0
    %393 = vmatprep.mubr.f32.mxu0 0.0
    %394 = vmatmul.mubr.f32.gmra.mrb[0].mxu0 %v328
    %v395 = vpop.f32.mrb[0].mxu0
    %v396 = vadd.f32 %v182, %v395
    %v397 = vpop.f32.mrb[0].mxu0
    %398 = vdwg.mxu0
    %s399 = scalar_lea.vmem [#allocation9], 8
    %400 = vst [vmem:[%s399] sm:$0xff] %v396
    %s401 = scalar_lea.vmem [#allocation3], 16
    %v402 = vld [vmem:[%s401] sm:$0xff]
    %403 = vmatprep.subr.mxu0 0.0
    %404 = vmatpush1.msra.mxu0 %v71
    %405 = vmatprep.subr.mxu0 0.0
    %406 = vmatpush1.msra.mxu0 %v72
    %407 = vmatprep.subr.mxu0 0.0
    %408 = vmatpush1.msra.mxu0 %v73
    %409 = vmatprep.subr.mxu0 0.0
    %410 = vmatpush1.msra.mxu0 %v74
    %411 = vmatprep.subr.mxu0 0.0
    %412 = vmatpush1.msra.mxu0 %v75
    %413 = vmatprep.subr.mxu0 0.0
    %414 = vmatpush1.msra.mxu0 %v76
    %415 = vmatprep.subr.mxu0 0.0
    %416 = vmatpush1.msra.mxu0 %v77
    %417 = vmatprep.subr.mxu0 0.0
    %418 = vmatpush1.msra.mxu0 %v78
    %419 = vmatprep.subr.mxu0 0.0
    %420 = vmatpush1.msra.mxu0 %v79
    %421 = vmatprep.subr.mxu0 0.0
    %422 = vmatpush1.msra.mxu0 %v80
    %423 = vmatprep.subr.mxu0 0.0
    %424 = vmatpush1.msra.mxu0 %v81
    %425 = vmatprep.subr.mxu0 0.0
    %426 = vmatpush1.msra.mxu0 %v82
    %427 = vmatprep.subr.mxu0 0.0
    %428 = vmatpush1.msra.mxu0 %v83
    %429 = vmatprep.subr.mxu0 0.0
    %430 = vmatpush1.msra.mxu0 %v84
    %431 = vmatprep.subr.mxu0 0.0
    %432 = vmatpush1.msra.mxu0 %v85
    %433 = vmatprep.subr.mxu0 0.0
    %434 = vmatpush1.msra.mxu0 %v86
    %435 = vmatprep.subr.mxu0 0.0
    %436 = vmatpush1.msra.mxu0 0.0
    %437 = vmatprep.subr.mxu0 0.0
    %438 = vmatpush1.msra.mxu0 0.0
    %439 = vmatprep.subr.mxu0 0.0
    %440 = vmatpush1.msra.mxu0 0.0
    %441 = vmatprep.subr.mxu0 0.0
    %442 = vmatpush1.msra.mxu0 0.0
    %443 = vmatprep.subr.mxu0 0.0
    %444 = vmatpush1.msra.mxu0 0.0
    %445 = vmatprep.subr.mxu0 0.0
    %446 = vmatpush1.msra.mxu0 0.0
    %447 = vmatprep.subr.mxu0 0.0
    %448 = vmatpush1.msra.mxu0 0.0
    %449 = vmatprep.subr.mxu0 0.0
    %450 = vmatpush1.msra.mxu0 0.0
    %451 = vmatprep.subr.mxu0 0.0
    %452 = vmatpush1.msra.mxu0 0.0
    %453 = vmatprep.subr.mxu0 0.0
    %454 = vmatpush1.msra.mxu0 0.0
    %455 = vmatprep.subr.mxu0 0.0
    %456 = vmatpush1.msra.mxu0 0.0
    %457 = vmatprep.subr.mxu0 0.0
    %458 = vmatpush1.msra.mxu0 0.0
    %459 = vmatprep.subr.mxu0 0.0
    %460 = vmatpush1.msra.mxu0 0.0
    %461 = vmatprep.subr.mxu0 0.0
    %462 = vmatpush1.msra.mxu0 0.0
    %463 = vmatprep.subr.mxu0 0.0
    %464 = vmatpush1.msra.mxu0 0.0
    %465 = vmatprep.subr.mxu0 0.0
    %466 = vmatpush1.msra.mxu0 0.0
    %467 = vmatprep.mubr.f32.mxu0 0.0
    %468 = vmatmul.mubr.f32.gmra.mrb[0].mxu0 %v328
    %v469 = vpop.f32.mrb[0].mxu0
    %v470 = vadd.f32 0.0, %v469
    %v471 = vpop.f32.mrb[0].mxu0
    %472 = vdwg.mxu0
    %v473 = vadd.f32 %v402, %v470
    %v474 = vtanh.pop %v473
    %475 = vmatprep.subr.mxu0 0.0
    %476 = vmatpush1.msra.mxu0 %v87
    %477 = vmatprep.subr.mxu0 0.0
    %478 = vmatpush1.msra.mxu0 %v88
    %479 = vmatprep.subr.mxu0 0.0
    %480 = vmatpush1.msra.mxu0 %v89
    %481 = vmatprep.subr.mxu0 0.0
    %482 = vmatpush1.msra.mxu0 %v90
    %483 = vmatprep.subr.mxu0 0.0
    %484 = vmatpush1.msra.mxu0 %v91
    %485 = vmatprep.subr.mxu0 0.0
    %486 = vmatpush1.msra.mxu0 %v92
    %487 = vmatprep.subr.mxu0 0.0
    %488 = vmatpush1.msra.mxu0 %v93
    %489 = vmatprep.subr.mxu0 0.0
    %490 = vmatpush1.msra.mxu0 %v94
    %491 = vmatprep.subr.mxu0 0.0
    %492 = vmatpush1.msra.mxu0 %v95
    %493 = vmatprep.subr.mxu0 0.0
    %494 = vmatpush1.msra.mxu0 %v96
    %495 = vmatprep.subr.mxu0 0.0
    %496 = vmatpush1.msra.mxu0 %v97
    %497 = vmatprep.subr.mxu0 0.0
    %498 = vmatpush1.msra.mxu0 %v98
    %499 = vmatprep.subr.mxu0 0.0
    %500 = vmatpush1.msra.mxu0 %v99
    %501 = vmatprep.subr.mxu0 0.0
    %502 = vmatpush1.msra.mxu0 %v100
    %503 = vmatprep.subr.mxu0 0.0
    %504 = vmatpush1.msra.mxu0 %v101
    %505 = vmatprep.subr.mxu0 0.0
    %506 = vmatpush1.msra.mxu0 %v102
    %507 = vmatprep.subr.mxu0 0.0
    %508 = vmatpush1.msra.mxu0 0.0
    %509 = vmatprep.subr.mxu0 0.0
    %510 = vmatpush1.msra.mxu0 0.0
    %511 = vmatprep.subr.mxu0 0.0
    %512 = vmatpush1.msra.mxu0 0.0
    %513 = vmatprep.subr.mxu0 0.0
    %514 = vmatpush1.msra.mxu0 0.0
    %515 = vmatprep.subr.mxu0 0.0
    %516 = vmatpush1.msra.mxu0 0.0
    %517 = vmatprep.subr.mxu0 0.0
    %518 = vmatpush1.msra.mxu0 0.0
    %519 = vmatprep.subr.mxu0 0.0
    %520 = vmatpush1.msra.mxu0 0.0
    %521 = vmatprep.subr.mxu0 0.0
    %522 = vmatpush1.msra.mxu0 0.0
    %523 = vmatprep.subr.mxu0 0.0
    %524 = vmatpush1.msra.mxu0 0.0
    %525 = vmatprep.subr.mxu0 0.0
    %526 = vmatpush1.msra.mxu0 0.0
    %527 = vmatprep.subr.mxu0 0.0
    %528 = vmatpush1.msra.mxu0 0.0
    %529 = vmatprep.subr.mxu0 0.0
    %530 = vmatpush1.msra.mxu0 0.0
    %531 = vmatprep.subr.mxu0 0.0
    %532 = vmatpush1.msra.mxu0 0.0
    %533 = vmatprep.subr.mxu0 0.0
    %534 = vmatpush1.msra.mxu0 0.0
    %535 = vmatprep.subr.mxu0 0.0
    %536 = vmatpush1.msra.mxu0 0.0
    %537 = vmatprep.subr.mxu0 0.0
    %538 = vmatpush1.msra.mxu0 0.0
    %539 = vmatprep.mubr.f32.mxu0 0.0
    %540 = vmatmul.mubr.f32.gmra.mrb[0].mxu0 %v474
    %v541 = vpop.f32.mrb[0].mxu0
    %v542 = vadd.f32 %v182, %v541
    %v543 = vpop.f32.mrb[0].mxu0
    %544 = vdwg.mxu0
    %s545 = scalar_lea.vmem [#allocation9], 16
    %546 = vst [vmem:[%s545] sm:$0xff] %v542
    %s547 = scalar_lea.vmem [#allocation3], 24
    %v548 = vld [vmem:[%s547] sm:$0xff]
    %549 = vmatprep.subr.mxu0 0.0
    %550 = vmatpush1.msra.mxu0 %v71
    %551 = vmatprep.subr.mxu0 0.0
    %552 = vmatpush1.msra.mxu0 %v72
    %553 = vmatprep.subr.mxu0 0.0
    %554 = vmatpush1.msra.mxu0 %v73
    %555 = vmatprep.subr.mxu0 0.0
    %556 = vmatpush1.msra.mxu0 %v74
    %557 = vmatprep.subr.mxu0 0.0
    %558 = vmatpush1.msra.mxu0 %v75
    %559 = vmatprep.subr.mxu0 0.0
    %560 = vmatpush1.msra.mxu0 %v76
    %561 = vmatprep.subr.mxu0 0.0
    %562 = vmatpush1.msra.mxu0 %v77
    %563 = vmatprep.subr.mxu0 0.0
    %564 = vmatpush1.msra.mxu0 %v78
    %565 = vmatprep.subr.mxu0 0.0
    %566 = vmatpush1.msra.mxu0 %v79
    %567 = vmatprep.subr.mxu0 0.0
    %568 = vmatpush1.msra.mxu0 %v80
    %569 = vmatprep.subr.mxu0 0.0
    %570 = vmatpush1.msra.mxu0 %v81
    %571 = vmatprep.subr.mxu0 0.0
    %572 = vmatpush1.msra.mxu0 %v82
    %573 = vmatprep.subr.mxu0 0.0
    %574 = vmatpush1.msra.mxu0 %v83
    %575 = vmatprep.subr.mxu0 0.0
    %576 = vmatpush1.msra.mxu0 %v84
    %577 = vmatprep.subr.mxu0 0.0
    %578 = vmatpush1.msra.mxu0 %v85
    %579 = vmatprep.subr.mxu0 0.0
    %580 = vmatpush1.msra.mxu0 %v86
    %581 = vmatprep.subr.mxu0 0.0
    %582 = vmatpush1.msra.mxu0 0.0
    %583 = vmatprep.subr.mxu0 0.0
    %584 = vmatpush1.msra.mxu0 0.0
    %585 = vmatprep.subr.mxu0 0.0
    %586 = vmatpush1.msra.mxu0 0.0
    %587 = vmatprep.subr.mxu0 0.0
    %588 = vmatpush1.msra.mxu0 0.0
    %589 = vmatprep.subr.mxu0 0.0
    %590 = vmatpush1.msra.mxu0 0.0
    %591 = vmatprep.subr.mxu0 0.0
    %592 = vmatpush1.msra.mxu0 0.0
    %593 = vmatprep.subr.mxu0 0.0
    %594 = vmatpush1.msra.mxu0 0.0
    %595 = vmatprep.subr.mxu0 0.0
    %596 = vmatpush1.msra.mxu0 0.0
    %597 = vmatprep.subr.mxu0 0.0
    %598 = vmatpush1.msra.mxu0 0.0
    %599 = vmatprep.subr.mxu0 0.0
    %600 = vmatpush1.msra.mxu0 0.0
    %601 = vmatprep.subr.mxu0 0.0
    %602 = vmatpush1.msra.mxu0 0.0
    %603 = vmatprep.subr.mxu0 0.0
    %604 = vmatpush1.msra.mxu0 0.0
    %605 = vmatprep.subr.mxu0 0.0
    %606 = vmatpush1.msra.mxu0 0.0
    %607 = vmatprep.subr.mxu0 0.0
    %608 = vmatpush1.msra.mxu0 0.0
    %609 = vmatprep.subr.mxu0 0.0
    %610 = vmatpush1.msra.mxu0 0.0
    %611 = vmatprep.subr.mxu0 0.0
    %612 = vmatpush1.msra.mxu0 0.0
    %613 = vmatprep.mubr.f32.mxu0 0.0
    %614 = vmatmul.mubr.f32.gmra.mrb[0].mxu0 %v474
    %v615 = vpop.f32.mrb[0].mxu0
    %v616 = vadd.f32 0.0, %v615
    %v617 = vpop.f32.mrb[0].mxu0
    %618 = vdwg.mxu0
    %v619 = vadd.f32 %v548, %v616
    %v620 = vtanh.pop %v619
    %621 = vmatprep.subr.mxu0 0.0
    %622 = vmatpush1.msra.mxu0 %v87
    %623 = vmatprep.subr.mxu0 0.0
    %624 = vmatpush1.msra.mxu0 %v88
    %625 = vmatprep.subr.mxu0 0.0
    %626 = vmatpush1.msra.mxu0 %v89
    %627 = vmatprep.subr.mxu0 0.0
    %628 = vmatpush1.msra.mxu0 %v90
    %629 = vmatprep.subr.mxu0 0.0
    %630 = vmatpush1.msra.mxu0 %v91
    %631 = vmatprep.subr.mxu0 0.0
    %632 = vmatpush1.msra.mxu0 %v92
    %633 = vmatprep.subr.mxu0 0.0
    %634 = vmatpush1.msra.mxu0 %v93
    %635 = vmatprep.subr.mxu0 0.0
    %636 = vmatpush1.msra.mxu0 %v94
    %637 = vmatprep.subr.mxu0 0.0
    %638 = vmatpush1.msra.mxu0 %v95
    %639 = vmatprep.subr.mxu0 0.0
    %640 = vmatpush1.msra.mxu0 %v96
    %641 = vmatprep.subr.mxu0 0.0
    %642 = vmatpush1.msra.mxu0 %v97
    %643 = vmatprep.subr.mxu0 0.0
    %644 = vmatpush1.msra.mxu0 %v98
    %645 = vmatprep.subr.mxu0 0.0
    %646 = vmatpush1.msra.mxu0 %v99
    %647 = vmatprep.subr.mxu0 0.0
    %648 = vmatpush1.msra.mxu0 %v100
    %649 = vmatprep.subr.mxu0 0.0
    %650 = vmatpush1.msra.mxu0 %v101
    %651 = vmatprep.subr.mxu0 0.0
    %652 = vmatpush1.msra.mxu0 %v102
    %653 = vmatprep.subr.mxu0 0.0
    %654 = vmatpush1.msra.mxu0 0.0
    %655 = vmatprep.subr.mxu0 0.0
    %656 = vmatpush1.msra.mxu0 0.0
    %657 = vmatprep.subr.mxu0 0.0
    %658 = vmatpush1.msra.mxu0 0.0
    %659 = vmatprep.subr.mxu0 0.0
    %660 = vmatpush1.msra.mxu0 0.0
    %661 = vmatprep.subr.mxu0 0.0
    %662 = vmatpush1.msra.mxu0 0.0
    %663 = vmatprep.subr.mxu0 0.0
    %664 = vmatpush1.msra.mxu0 0.0
    %665 = vmatprep.subr.mxu0 0.0
    %666 = vmatpush1.msra.mxu0 0.0
    %667 = vmatprep.subr.mxu0 0.0
    %668 = vmatpush1.msra.mxu0 0.0
    %669 = vmatprep.subr.mxu0 0.0
    %670 = vmatpush1.msra.mxu0 0.0
    %671 = vmatprep.subr.mxu0 0.0
    %672 = vmatpush1.msra.mxu0 0.0
    %673 = vmatprep.subr.mxu0 0.0
    %674 = vmatpush1.msra.mxu0 0.0
    %675 = vmatprep.subr.mxu0 0.0
    %676 = vmatpush1.msra.mxu0 0.0
    %677 = vmatprep.subr.mxu0 0.0
    %678 = vmatpush1.msra.mxu0 0.0
    %679 = vmatprep.subr.mxu0 0.0
    %680 = vmatpush1.msra.mxu0 0.0
    %681 = vmatprep.subr.mxu0 0.0
    %682 = vmatpush1.msra.mxu0 0.0
    %683 = vmatprep.subr.mxu0 0.0
    %684 = vmatpush1.msra.mxu0 0.0
    %685 = vmatprep.mubr.f32.mxu0 0.0
    %686 = vmatmul.mubr.f32.gmra.mrb[0].mxu0 %v620
    %v687 = vpop.f32.mrb[0].mxu0
    %v688 = vadd.f32 %v182, %v687
    %v689 = vpop.f32.mrb[0].mxu0
    %690 = vdwg.mxu0
    %s691 = scalar_lea.vmem [#allocation9], 24
    %692 = vst [vmem:[%s691] sm:$0xff] %v688
    %s693 = scalar_lea.vmem [#allocation3], 32
    %v694 = vld [vmem:[%s693] sm:$0xff]
    %695 = vmatprep.subr.mxu0 0.0
    %696 = vmatpush1.msra.mxu0 %v71
    %697 = vmatprep.subr.mxu0 0.0
    %698 = vmatpush1.msra.mxu0 %v72
    %699 = vmatprep.subr.mxu0 0.0
    %700 = vmatpush1.msra.mxu0 %v73
    %701 = vmatprep.subr.mxu0 0.0
    %702 = vmatpush1.msra.mxu0 %v74
    %703 = vmatprep.subr.mxu0 0.0
    %704 = vmatpush1.msra.mxu0 %v75
    %705 = vmatprep.subr.mxu0 0.0
    %706 = vmatpush1.msra.mxu0 %v76
    %707 = vmatprep.subr.mxu0 0.0
    %708 = vmatpush1.msra.mxu0 %v77
    %709 = vmatprep.subr.mxu0 0.0
    %710 = vmatpush1.msra.mxu0 %v78
    %711 = vmatprep.subr.mxu0 0.0
    %712 = vmatpush1.msra.mxu0 %v79
    %713 = vmatprep.subr.mxu0 0.0
    %714 = vmatpush1.msra.mxu0 %v80
    %715 = vmatprep.subr.mxu0 0.0
    %716 = vmatpush1.msra.mxu0 %v81
    %717 = vmatprep.subr.mxu0 0.0
    %718 = vmatpush1.msra.mxu0 %v82
    %719 = vmatprep.subr.mxu0 0.0
    %720 = vmatpush1.msra.mxu0 %v83
    %721 = vmatprep.subr.mxu0 0.0
    %722 = vmatpush1.msra.mxu0 %v84
    %723 = vmatprep.subr.mxu0 0.0
    %724 = vmatpush1.msra.mxu0 %v85
    %725 = vmatprep.subr.mxu0 0.0
    %726 = vmatpush1.msra.mxu0 %v86
    %727 = vmatprep.subr.mxu0 0.0
    %728 = vmatpush1.msra.mxu0 0.0
    %729 = vmatprep.subr.mxu0 0.0
    %730 = vmatpush1.msra.mxu0 0.0
    %731 = vmatprep.subr.mxu0 0.0
    %732 = vmatpush1.msra.mxu0 0.0
    %733 = vmatprep.subr.mxu0 0.0
    %734 = vmatpush1.msra.mxu0 0.0
    %735 = vmatprep.subr.mxu0 0.0
    %736 = vmatpush1.msra.mxu0 0.0
    %737 = vmatprep.subr.mxu0 0.0
    %738 = vmatpush1.msra.mxu0 0.0
    %739 = vmatprep.subr.mxu0 0.0
    %740 = vmatpush1.msra.mxu0 0.0
    %741 = vmatprep.subr.mxu0 0.0
    %742 = vmatpush1.msra.mxu0 0.0
    %743 = vmatprep.subr.mxu0 0.0
    %744 = vmatpush1.msra.mxu0 0.0
    %745 = vmatprep.subr.mxu0 0.0
    %746 = vmatpush1.msra.mxu0 0.0
    %747 = vmatprep.subr.mxu0 0.0
    %748 = vmatpush1.msra.mxu0 0.0
    %749 = vmatprep.subr.mxu0 0.0
    %750 = vmatpush1.msra.mxu0 0.0
    %751 = vmatprep.subr.mxu0 0.0
    %752 = vmatpush1.msra.mxu0 0.0
    %753 = vmatprep.subr.mxu0 0.0
    %754 = vmatpush1.msra.mxu0 0.0
    %755 = vmatprep.subr.mxu0 0.0
    %756 = vmatpush1.msra.mxu0 0.0
    %757 = vmatprep.subr.mxu0 0.0
    %758 = vmatpush1.msra.mxu0 0.0
    %759 = vmatprep.mubr.f32.mxu0 0.0
    %760 = vmatmul.mubr.f32.gmra.mrb[0].mxu0 %v620
    %v761 = vpop.f32.mrb[0].mxu0
    %v762 = vadd.f32 0.0, %v761
    %v763 = vpop.f32.mrb[0].mxu0
    %764 = vdwg.mxu0
    %v765 = vadd.f32 %v694, %v762
    %v766 = vtanh.pop %v765
    %767 = vmatprep.subr.mxu0 0.0
    %768 = vmatpush1.msra.mxu0 %v87
    %769 = vmatprep.subr.mxu0 0.0
    %770 = vmatpush1.msra.mxu0 %v88
    %771 = vmatprep.subr.mxu0 0.0
    %772 = vmatpush1.msra.mxu0 %v89
    %773 = vmatprep.subr.mxu0 0.0
    %774 = vmatpush1.msra.mxu0 %v90
    %775 = vmatprep.subr.mxu0 0.0
    %776 = vmatpush1.msra.mxu0 %v91
    %777 = vmatprep.subr.mxu0 0.0
    %778 = vmatpush1.msra.mxu0 %v92
    %779 = vmatprep.subr.mxu0 0.0
    %780 = vmatpush1.msra.mxu0 %v93
    %781 = vmatprep.subr.mxu0 0.0
    %782 = vmatpush1.msra.mxu0 %v94
    %783 = vmatprep.subr.mxu0 0.0
    %784 = vmatpush1.msra.mxu0 %v95
    %785 = vmatprep.subr.mxu0 0.0
    %786 = vmatpush1.msra.mxu0 %v96
    %787 = vmatprep.subr.mxu0 0.0
    %788 = vmatpush1.msra.mxu0 %v97
    %789 = vmatprep.subr.mxu0 0.0
    %790 = vmatpush1.msra.mxu0 %v98
    %791 = vmatprep.subr.mxu0 0.0
    %792 = vmatpush1.msra.mxu0 %v99
    %793 = vmatprep.subr.mxu0 0.0
    %794 = vmatpush1.msra.mxu0 %v100
    %795 = vmatprep.subr.mxu0 0.0
    %796 = vmatpush1.msra.mxu0 %v101
    %797 = vmatprep.subr.mxu0 0.0
    %798 = vmatpush1.msra.mxu0 %v102
    %799 = vmatprep.subr.mxu0 0.0
    %800 = vmatpush1.msra.mxu0 0.0
    %801 = vmatprep.subr.mxu0 0.0
    %802 = vmatpush1.msra.mxu0 0.0
    %803 = vmatprep.subr.mxu0 0.0
    %804 = vmatpush1.msra.mxu0 0.0
    %805 = vmatprep.subr.mxu0 0.0
    %806 = vmatpush1.msra.mxu0 0.0
    %807 = vmatprep.subr.mxu0 0.0
    %808 = vmatpush1.msra.mxu0 0.0
    %809 = vmatprep.subr.mxu0 0.0
    %810 = vmatpush1.msra.mxu0 0.0
    %811 = vmatprep.subr.mxu0 0.0
    %812 = vmatpush1.msra.mxu0 0.0
    %813 = vmatprep.subr.mxu0 0.0
    %814 = vmatpush1.msra.mxu0 0.0
    %815 = vmatprep.subr.mxu0 0.0
    %816 = vmatpush1.msra.mxu0 0.0
    %817 = vmatprep.subr.mxu0 0.0
    %818 = vmatpush1.msra.mxu0 0.0
    %819 = vmatprep.subr.mxu0 0.0
    %820 = vmatpush1.msra.mxu0 0.0
    %821 = vmatprep.subr.mxu0 0.0
    %822 = vmatpush1.msra.mxu0 0.0
    %823 = vmatprep.subr.mxu0 0.0
    %824 = vmatpush1.msra.mxu0 0.0
    %825 = vmatprep.subr.mxu0 0.0
    %826 = vmatpush1.msra.mxu0 0.0
    %827 = vmatprep.subr.mxu0 0.0
    %828 = vmatpush1.msra.mxu0 0.0
    %829 = vmatprep.subr.mxu0 0.0
    %830 = vmatpush1.msra.mxu0 0.0
    %831 = vmatprep.mubr.f32.mxu0 0.0
    %832 = vmatmul.mubr.f32.gmra.mrb[0].mxu0 %v766
    %v833 = vpop.f32.mrb[0].mxu0
    %v834 = vadd.f32 %v182, %v833
    %v835 = vpop.f32.mrb[0].mxu0
    %836 = vdwg.mxu0
    %s837 = scalar_lea.vmem [#allocation9], 32
    %838 = vst [vmem:[%s837] sm:$0xff] %v834
    %s839 = scalar_lea.vmem [#allocation3], 40
    %v840 = vld [vmem:[%s839] sm:$0xff]
    %841 = vmatprep.subr.mxu0 0.0
    %842 = vmatpush1.msra.mxu0 %v71
    %843 = vmatprep.subr.mxu0 0.0
    %844 = vmatpush1.msra.mxu0 %v72
    %845 = vmatprep.subr.mxu0 0.0
    %846 = vmatpush1.msra.mxu0 %v73
    %847 = vmatprep.subr.mxu0 0.0
    %848 = vmatpush1.msra.mxu0 %v74
    %849 = vmatprep.subr.mxu0 0.0
    %850 = vmatpush1.msra.mxu0 %v75
    %851 = vmatprep.subr.mxu0 0.0
    %852 = vmatpush1.msra.mxu0 %v76
    %853 = vmatprep.subr.mxu0 0.0
    %854 = vmatpush1.msra.mxu0 %v77
    %855 = vmatprep.subr.mxu0 0.0
    %856 = vmatpush1.msra.mxu0 %v78
    %857 = vmatprep.subr.mxu0 0.0
    %858 = vmatpush1.msra.mxu0 %v79
    %859 = vmatprep.subr.mxu0 0.0
    %860 = vmatpush1.msra.mxu0 %v80
    %861 = vmatprep.subr.mxu0 0.0
    %862 = vmatpush1.msra.mxu0 %v81
    %863 = vmatprep.subr.mxu0 0.0
    %864 = vmatpush1.msra.mxu0 %v82
    %865 = vmatprep.subr.mxu0 0.0
    %866 = vmatpush1.msra.mxu0 %v83
    %867 = vmatprep.subr.mxu0 0.0
    %868 = vmatpush1.msra.mxu0 %v84
    %869 = vmatprep.subr.mxu0 0.0
    %870 = vmatpush1.msra.mxu0 %v85
    %871 = vmatprep.subr.mxu0 0.0
    %872 = vmatpush1.msra.mxu0 %v86
    %873 = vmatprep.subr.mxu0 0.0
    %874 = vmatpush1.msra.mxu0 0.0
    %875 = vmatprep.subr.mxu0 0.0
    %876 = vmatpush1.msra.mxu0 0.0
    %877 = vmatprep.subr.mxu0 0.0
    %878 = vmatpush1.msra.mxu0 0.0
    %879 = vmatprep.subr.mxu0 0.0
    %880 = vmatpush1.msra.mxu0 0.0
    %881 = vmatprep.subr.mxu0 0.0
    %882 = vmatpush1.msra.mxu0 0.0
    %883 = vmatprep.subr.mxu0 0.0
    %884 = vmatpush1.msra.mxu0 0.0
    %885 = vmatprep.subr.mxu0 0.0
    %886 = vmatpush1.msra.mxu0 0.0
    %887 = vmatprep.subr.mxu0 0.0
    %888 = vmatpush1.msra.mxu0 0.0
    %889 = vmatprep.subr.mxu0 0.0
    %890 = vmatpush1.msra.mxu0 0.0
    %891 = vmatprep.subr.mxu0 0.0
    %892 = vmatpush1.msra.mxu0 0.0
    %893 = vmatprep.subr.mxu0 0.0
    %894 = vmatpush1.msra.mxu0 0.0
    %895 = vmatprep.subr.mxu0 0.0
    %896 = vmatpush1.msra.mxu0 0.0
    %897 = vmatprep.subr.mxu0 0.0
    %898 = vmatpush1.msra.mxu0 0.0
    %899 = vmatprep.subr.mxu0 0.0
    %900 = vmatpush1.msra.mxu0 0.0
    %901 = vmatprep.subr.mxu0 0.0
    %902 = vmatpush1.msra.mxu0 0.0
    %903 = vmatprep.subr.mxu0 0.0
    %904 = vmatpush1.msra.mxu0 0.0
    %905 = vmatprep.mubr.f32.mxu0 0.0
    %906 = vmatmul.mubr.f32.gmra.mrb[0].mxu0 %v766
    %v907 = vpop.f32.mrb[0].mxu0
    %v908 = vadd.f32 0.0, %v907
    %v909 = vpop.f32.mrb[0].mxu0
    %910 = vdwg.mxu0
    %v911 = vadd.f32 %v840, %v908
    %v912 = vtanh.pop %v911
    %913 = vmatprep.subr.mxu0 0.0
    %914 = vmatpush1.msra.mxu0 %v87
    %915 = vmatprep.subr.mxu0 0.0
    %916 = vmatpush1.msra.mxu0 %v88
    %917 = vmatprep.subr.mxu0 0.0
    %918 = vmatpush1.msra.mxu0 %v89
    %919 = vmatprep.subr.mxu0 0.0
    %920 = vmatpush1.msra.mxu0 %v90
    %921 = vmatprep.subr.mxu0 0.0
    %922 = vmatpush1.msra.mxu0 %v91
    %923 = vmatprep.subr.mxu0 0.0
    %924 = vmatpush1.msra.mxu0 %v92
    %925 = vmatprep.subr.mxu0 0.0
    %926 = vmatpush1.msra.mxu0 %v93
    %927 = vmatprep.subr.mxu0 0.0
    %928 = vmatpush1.msra.mxu0 %v94
    %929 = vmatprep.subr.mxu0 0.0
    %930 = vmatpush1.msra.mxu0 %v95
    %931 = vmatprep.subr.mxu0 0.0
    %932 = vmatpush1.msra.mxu0 %v96
    %933 = vmatprep.subr.mxu0 0.0
    %934 = vmatpush1.msra.mxu0 %v97
    %935 = vmatprep.subr.mxu0 0.0
    %936 = vmatpush1.msra.mxu0 %v98
    %937 = vmatprep.subr.mxu0 0.0
    %938 = vmatpush1.msra.mxu0 %v99
    %939 = vmatprep.subr.mxu0 0.0
    %940 = vmatpush1.msra.mxu0 %v100
    %941 = vmatprep.subr.mxu0 0.0
    %942 = vmatpush1.msra.mxu0 %v101
    %943 = vmatprep.subr.mxu0 0.0
    %944 = vmatpush1.msra.mxu0 %v102
    %945 = vmatprep.subr.mxu0 0.0
    %946 = vmatpush1.msra.mxu0 0.0
    %947 = vmatprep.subr.mxu0 0.0
    %948 = vmatpush1.msra.mxu0 0.0
    %949 = vmatprep.subr.mxu0 0.0
    %950 = vmatpush1.msra.mxu0 0.0
    %951 = vmatprep.subr.mxu0 0.0
    %952 = vmatpush1.msra.mxu0 0.0
    %953 = vmatprep.subr.mxu0 0.0
    %954 = vmatpush1.msra.mxu0 0.0
    %955 = vmatprep.subr.mxu0 0.0
    %956 = vmatpush1.msra.mxu0 0.0
    %957 = vmatprep.subr.mxu0 0.0
    %958 = vmatpush1.msra.mxu0 0.0
    %959 = vmatprep.subr.mxu0 0.0
    %960 = vmatpush1.msra.mxu0 0.0
    %961 = vmatprep.subr.mxu0 0.0
    %962 = vmatpush1.msra.mxu0 0.0
    %963 = vmatprep.subr.mxu0 0.0
    %964 = vmatpush1.msra.mxu0 0.0
    %965 = vmatprep.subr.mxu0 0.0
    %966 = vmatpush1.msra.mxu0 0.0
    %967 = vmatprep.subr.mxu0 0.0
    %968 = vmatpush1.msra.mxu0 0.0
    %969 = vmatprep.subr.mxu0 0.0
    %970 = vmatpush1.msra.mxu0 0.0
    %971 = vmatprep.subr.mxu0 0.0
    %972 = vmatpush1.msra.mxu0 0.0
    %973 = vmatprep.subr.mxu0 0.0
    %974 = vmatpush1.msra.mxu0 0.0
    %975 = vmatprep.subr.mxu0 0.0
    %976 = vmatpush1.msra.mxu0 0.0
    %977 = vmatprep.mubr.f32.mxu0 0.0
    %978 = vmatmul.mubr.f32.gmra.mrb[0].mxu0 %v912
    %v979 = vpop.f32.mrb[0].mxu0
    %v980 = vadd.f32 %v182, %v979
    %v981 = vpop.f32.mrb[0].mxu0
    %982 = vdwg.mxu0
    %s983 = scalar_lea.vmem [#allocation9], 40
    %984 = vst [vmem:[%s983] sm:$0xff] %v980
    %s985 = scalar_lea.vmem [#allocation3], 48
    %v986 = vld [vmem:[%s985] sm:$0xff]
    %987 = vmatprep.subr.mxu0 0.0
    %988 = vmatpush1.msra.mxu0 %v71
    %989 = vmatprep.subr.mxu0 0.0
    %990 = vmatpush1.msra.mxu0 %v72
    %991 = vmatprep.subr.mxu0 0.0
    %992 = vmatpush1.msra.mxu0 %v73
    %993 = vmatprep.subr.mxu0 0.0
    %994 = vmatpush1.msra.mxu0 %v74
    %995 = vmatprep.subr.mxu0 0.0
    %996 = vmatpush1.msra.mxu0 %v75
    %997 = vmatprep.subr.mxu0 0.0
    %998 = vmatpush1.msra.mxu0 %v76
    %999 = vmatprep.subr.mxu0 0.0
    %1000 = vmatpush1.msra.mxu0 %v77
    %1001 = vmatprep.subr.mxu0 0.0
    %1002 = vmatpush1.msra.mxu0 %v78
    %1003 = vmatprep.subr.mxu0 0.0
    %1004 = vmatpush1.msra.mxu0 %v79
    %1005 = vmatprep.subr.mxu0 0.0
    %1006 = vmatpush1.msra.mxu0 %v80
    %1007 = vmatprep.subr.mxu0 0.0
    %1008 = vmatpush1.msra.mxu0 %v81
    %1009 = vmatprep.subr.mxu0 0.0
    %1010 = vmatpush1.msra.mxu0 %v82
    %1011 = vmatprep.subr.mxu0 0.0
    %1012 = vmatpush1.msra.mxu0 %v83
    %1013 = vmatprep.subr.mxu0 0.0
    %1014 = vmatpush1.msra.mxu0 %v84
    %1015 = vmatprep.subr.mxu0 0.0
    %1016 = vmatpush1.msra.mxu0 %v85
    %1017 = vmatprep.subr.mxu0 0.0
    %1018 = vmatpush1.msra.mxu0 %v86
    %1019 = vmatprep.subr.mxu0 0.0
    %1020 = vmatpush1.msra.mxu0 0.0
    %1021 = vmatprep.subr.mxu0 0.0
    %1022 = vmatpush1.msra.mxu0 0.0
    %1023 = vmatprep.subr.mxu0 0.0
    %1024 = vmatpush1.msra.mxu0 0.0
    %1025 = vmatprep.subr.mxu0 0.0
    %1026 = vmatpush1.msra.mxu0 0.0
    %1027 = vmatprep.subr.mxu0 0.0
    %1028 = vmatpush1.msra.mxu0 0.0
    %1029 = vmatprep.subr.mxu0 0.0
    %1030 = vmatpush1.msra.mxu0 0.0
    %1031 = vmatprep.subr.mxu0 0.0
    %1032 = vmatpush1.msra.mxu0 0.0
    %1033 = vmatprep.subr.mxu0 0.0
    %1034 = vmatpush1.msra.mxu0 0.0
    %1035 = vmatprep.subr.mxu0 0.0
    %1036 = vmatpush1.msra.mxu0 0.0
    %1037 = vmatprep.subr.mxu0 0.0
    %1038 = vmatpush1.msra.mxu0 0.0
    %1039 = vmatprep.subr.mxu0 0.0
    %1040 = vmatpush1.msra.mxu0 0.0
    %1041 = vmatprep.subr.mxu0 0.0
    %1042 = vmatpush1.msra.mxu0 0.0
    %1043 = vmatprep.subr.mxu0 0.0
    %1044 = vmatpush1.msra.mxu0 0.0
    %1045 = vmatprep.subr.mxu0 0.0
    %1046 = vmatpush1.msra.mxu0 0.0
    %1047 = vmatprep.subr.mxu0 0.0
    %1048 = vmatpush1.msra.mxu0 0.0
    %1049 = vmatprep.subr.mxu0 0.0
    %1050 = vmatpush1.msra.mxu0 0.0
    %1051 = vmatprep.mubr.f32.mxu0 0.0
    %1052 = vmatmul.mubr.f32.gmra.mrb[0].mxu0 %v912
    %v1053 = vpop.f32.mrb[0].mxu0
    %v1054 = vadd.f32 0.0, %v1053
    %v1055 = vpop.f32.mrb[0].mxu0
    %1056 = vdwg.mxu0
    %v1057 = vadd.f32 %v986, %v1054
    %v1058 = vtanh.pop %v1057
    %1059 = vmatprep.subr.mxu0 0.0
    %1060 = vmatpush1.msra.mxu0 %v87
    %1061 = vmatprep.subr.mxu0 0.0
    %1062 = vmatpush1.msra.mxu0 %v88
    %1063 = vmatprep.subr.mxu0 0.0
    %1064 = vmatpush1.msra.mxu0 %v89
    %1065 = vmatprep.subr.mxu0 0.0
    %1066 = vmatpush1.msra.mxu0 %v90
    %1067 = vmatprep.subr.mxu0 0.0
    %1068 = vmatpush1.msra.mxu0 %v91
    %1069 = vmatprep.subr.mxu0 0.0
    %1070 = vmatpush1.msra.mxu0 %v92
    %1071 = vmatprep.subr.mxu0 0.0
    %1072 = vmatpush1.msra.mxu0 %v93
    %1073 = vmatprep.subr.mxu0 0.0
    %1074 = vmatpush1.msra.mxu0 %v94
    %1075 = vmatprep.subr.mxu0 0.0
    %1076 = vmatpush1.msra.mxu0 %v95
    %1077 = vmatprep.subr.mxu0 0.0
    %1078 = vmatpush1.msra.mxu0 %v96
    %1079 = vmatprep.subr.mxu0 0.0
    %1080 = vmatpush1.msra.mxu0 %v97
    %1081 = vmatprep.subr.mxu0 0.0
    %1082 = vmatpush1.msra.mxu0 %v98
    %1083 = vmatprep.subr.mxu0 0.0
    %1084 = vmatpush1.msra.mxu0 %v99
    %1085 = vmatprep.subr.mxu0 0.0
    %1086 = vmatpush1.msra.mxu0 %v100
    %1087 = vmatprep.subr.mxu0 0.0
    %1088 = vmatpush1.msra.mxu0 %v101
    %1089 = vmatprep.subr.mxu0 0.0
    %1090 = vmatpush1.msra.mxu0 %v102
    %1091 = vmatprep.subr.mxu0 0.0
    %1092 = vmatpush1.msra.mxu0 0.0
    %1093 = vmatprep.subr.mxu0 0.0
    %1094 = vmatpush1.msra.mxu0 0.0
    %1095 = vmatprep.subr.mxu0 0.0
    %1096 = vmatpush1.msra.mxu0 0.0
    %1097 = vmatprep.subr.mxu0 0.0
    %1098 = vmatpush1.msra.mxu0 0.0
    %1099 = vmatprep.subr.mxu0 0.0
    %1100 = vmatpush1.msra.mxu0 0.0
    %1101 = vmatprep.subr.mxu0 0.0
    %1102 = vmatpush1.msra.mxu0 0.0
    %1103 = vmatprep.subr.mxu0 0.0
    %1104 = vmatpush1.msra.mxu0 0.0
    %1105 = vmatprep.subr.mxu0 0.0
    %1106 = vmatpush1.msra.mxu0 0.0
    %1107 = vmatprep.subr.mxu0 0.0
    %1108 = vmatpush1.msra.mxu0 0.0
    %1109 = vmatprep.subr.mxu0 0.0
    %1110 = vmatpush1.msra.mxu0 0.0
    %1111 = vmatprep.subr.mxu0 0.0
    %1112 = vmatpush1.msra.mxu0 0.0
    %1113 = vmatprep.subr.mxu0 0.0
    %1114 = vmatpush1.msra.mxu0 0.0
    %1115 = vmatprep.subr.mxu0 0.0
    %1116 = vmatpush1.msra.mxu0 0.0
    %1117 = vmatprep.subr.mxu0 0.0
    %1118 = vmatpush1.msra.mxu0 0.0
    %1119 = vmatprep.subr.mxu0 0.0
    %1120 = vmatpush1.msra.mxu0 0.0
    %1121 = vmatprep.subr.mxu0 0.0
    %1122 = vmatpush1.msra.mxu0 0.0
    %1123 = vmatprep.mubr.f32.mxu0 0.0
    %1124 = vmatmul.mubr.f32.gmra.mrb[0].mxu0 %v1058
    %v1125 = vpop.f32.mrb[0].mxu0
    %v1126 = vadd.f32 %v182, %v1125
    %v1127 = vpop.f32.mrb[0].mxu0
    %1128 = vdwg.mxu0
    %s1129 = scalar_lea.vmem [#allocation9], 48
    %1130 = vst [vmem:[%s1129] sm:$0xff] %v1126
    %s1131 = scalar_lea.vmem [#allocation3], 56
    %v1132 = vld [vmem:[%s1131] sm:$0xff]
    %1133 = vmatprep.subr.mxu0 0.0
    %1134 = vmatpush1.msra.mxu0 %v71
    %1135 = vmatprep.subr.mxu0 0.0
    %1136 = vmatpush1.msra.mxu0 %v72
    %1137 = vmatprep.subr.mxu0 0.0
    %1138 = vmatpush1.msra.mxu0 %v73
    %1139 = vmatprep.subr.mxu0 0.0
    %1140 = vmatpush1.msra.mxu0 %v74
    %1141 = vmatprep.subr.mxu0 0.0
    %1142 = vmatpush1.msra.mxu0 %v75
    %1143 = vmatprep.subr.mxu0 0.0
    %1144 = vmatpush1.msra.mxu0 %v76
    %1145 = vmatprep.subr.mxu0 0.0
    %1146 = vmatpush1.msra.mxu0 %v77
    %1147 = vmatprep.subr.mxu0 0.0
    %1148 = vmatpush1.msra.mxu0 %v78
    %1149 = vmatprep.subr.mxu0 0.0
    %1150 = vmatpush1.msra.mxu0 %v79
    %1151 = vmatprep.subr.mxu0 0.0
    %1152 = vmatpush1.msra.mxu0 %v80
    %1153 = vmatprep.subr.mxu0 0.0
    %1154 = vmatpush1.msra.mxu0 %v81
    %1155 = vmatprep.subr.mxu0 0.0
    %1156 = vmatpush1.msra.mxu0 %v82
    %1157 = vmatprep.subr.mxu0 0.0
    %1158 = vmatpush1.msra.mxu0 %v83
    %1159 = vmatprep.subr.mxu0 0.0
    %1160 = vmatpush1.msra.mxu0 %v84
    %1161 = vmatprep.subr.mxu0 0.0
    %1162 = vmatpush1.msra.mxu0 %v85
    %1163 = vmatprep.subr.mxu0 0.0
    %1164 = vmatpush1.msra.mxu0 %v86
    %1165 = vmatprep.subr.mxu0 0.0
    %1166 = vmatpush1.msra.mxu0 0.0
    %1167 = vmatprep.subr.mxu0 0.0
    %1168 = vmatpush1.msra.mxu0 0.0
    %1169 = vmatprep.subr.mxu0 0.0
    %1170 = vmatpush1.msra.mxu0 0.0
    %1171 = vmatprep.subr.mxu0 0.0
    %1172 = vmatpush1.msra.mxu0 0.0
    %1173 = vmatprep.subr.mxu0 0.0
    %1174 = vmatpush1.msra.mxu0 0.0
    %1175 = vmatprep.subr.mxu0 0.0
    %1176 = vmatpush1.msra.mxu0 0.0
    %1177 = vmatprep.subr.mxu0 0.0
    %1178 = vmatpush1.msra.mxu0 0.0
    %1179 = vmatprep.subr.mxu0 0.0
    %1180 = vmatpush1.msra.mxu0 0.0
    %1181 = vmatprep.subr.mxu0 0.0
    %1182 = vmatpush1.msra.mxu0 0.0
    %1183 = vmatprep.subr.mxu0 0.0
    %1184 = vmatpush1.msra.mxu0 0.0
    %1185 = vmatprep.subr.mxu0 0.0
    %1186 = vmatpush1.msra.mxu0 0.0
    %1187 = vmatprep.subr.mxu0 0.0
    %1188 = vmatpush1.msra.mxu0 0.0
    %1189 = vmatprep.subr.mxu0 0.0
    %1190 = vmatpush1.msra.mxu0 0.0
    %1191 = vmatprep.subr.mxu0 0.0
    %1192 = vmatpush1.msra.mxu0 0.0
    %1193 = vmatprep.subr.mxu0 0.0
    %1194 = vmatpush1.msra.mxu0 0.0
    %1195 = vmatprep.subr.mxu0 0.0
    %1196 = vmatpush1.msra.mxu0 0.0
    %1197 = vmatprep.mubr.f32.mxu0 0.0
    %1198 = vmatmul.mubr.f32.gmra.mrb[0].mxu0 %v1058
    %v1199 = vpop.f32.mrb[0].mxu0
    %v1200 = vadd.f32 0.0, %v1199
    %v1201 = vpop.f32.mrb[0].mxu0
    %1202 = vdwg.mxu0
    %v1203 = vadd.f32 %v1132, %v1200
    %v1204 = vtanh.pop %v1203
    %1205 = vmatprep.subr.mxu0 0.0
    %1206 = vmatpush1.msra.mxu0 %v87
    %1207 = vmatprep.subr.mxu0 0.0
    %1208 = vmatpush1.msra.mxu0 %v88
    %1209 = vmatprep.subr.mxu0 0.0
    %1210 = vmatpush1.msra.mxu0 %v89
    %1211 = vmatprep.subr.mxu0 0.0
    %1212 = vmatpush1.msra.mxu0 %v90
    %1213 = vmatprep.subr.mxu0 0.0
    %1214 = vmatpush1.msra.mxu0 %v91
    %1215 = vmatprep.subr.mxu0 0.0
    %1216 = vmatpush1.msra.mxu0 %v92
    %1217 = vmatprep.subr.mxu0 0.0
    %1218 = vmatpush1.msra.mxu0 %v93
    %1219 = vmatprep.subr.mxu0 0.0
    %1220 = vmatpush1.msra.mxu0 %v94
    %1221 = vmatprep.subr.mxu0 0.0
    %1222 = vmatpush1.msra.mxu0 %v95
    %1223 = vmatprep.subr.mxu0 0.0
    %1224 = vmatpush1.msra.mxu0 %v96
    %1225 = vmatprep.subr.mxu0 0.0
    %1226 = vmatpush1.msra.mxu0 %v97
    %1227 = vmatprep.subr.mxu0 0.0
    %1228 = vmatpush1.msra.mxu0 %v98
    %1229 = vmatprep.subr.mxu0 0.0
    %1230 = vmatpush1.msra.mxu0 %v99
    %1231 = vmatprep.subr.mxu0 0.0
    %1232 = vmatpush1.msra.mxu0 %v100
    %1233 = vmatprep.subr.mxu0 0.0
    %1234 = vmatpush1.msra.mxu0 %v101
    %1235 = vmatprep.subr.mxu0 0.0
    %1236 = vmatpush1.msra.mxu0 %v102
    %1237 = vmatprep.subr.mxu0 0.0
    %1238 = vmatpush1.msra.mxu0 0.0
    %1239 = vmatprep.subr.mxu0 0.0
    %1240 = vmatpush1.msra.mxu0 0.0
    %1241 = vmatprep.subr.mxu0 0.0
    %1242 = vmatpush1.msra.mxu0 0.0
    %1243 = vmatprep.subr.mxu0 0.0
    %1244 = vmatpush1.msra.mxu0 0.0
    %1245 = vmatprep.subr.mxu0 0.0
    %1246 = vmatpush1.msra.mxu0 0.0
    %1247 = vmatprep.subr.mxu0 0.0
    %1248 = vmatpush1.msra.mxu0 0.0
    %1249 = vmatprep.subr.mxu0 0.0
    %1250 = vmatpush1.msra.mxu0 0.0
    %1251 = vmatprep.subr.mxu0 0.0
    %1252 = vmatpush1.msra.mxu0 0.0
    %1253 = vmatprep.subr.mxu0 0.0
    %1254 = vmatpush1.msra.mxu0 0.0
    %1255 = vmatprep.subr.mxu0 0.0
    %1256 = vmatpush1.msra.mxu0 0.0
    %1257 = vmatprep.subr.mxu0 0.0
    %1258 = vmatpush1.msra.mxu0 0.0
    %1259 = vmatprep.subr.mxu0 0.0
    %1260 = vmatpush1.msra.mxu0 0.0
    %1261 = vmatprep.subr.mxu0 0.0
    %1262 = vmatpush1.msra.mxu0 0.0
    %1263 = vmatprep.subr.mxu0 0.0
    %1264 = vmatpush1.msra.mxu0 0.0
    %1265 = vmatprep.subr.mxu0 0.0
    %1266 = vmatpush1.msra.mxu0 0.0
    %1267 = vmatprep.subr.mxu0 0.0
    %1268 = vmatpush1.msra.mxu0 0.0
    %1269 = vmatprep.mubr.f32.mxu0 0.0
    %1270 = vmatmul.mubr.f32.gmra.mrb[0].mxu0 %v1204
    %v1271 = vpop.f32.mrb[0].mxu0
    %v1272 = vadd.f32 %v182, %v1271
    %v1273 = vpop.f32.mrb[0].mxu0
    %1274 = vdwg.mxu0
    %s1275 = scalar_lea.vmem [#allocation9], 56
    %1276 = vst [vmem:[%s1275] sm:$0xff] %v1272
    %1277 = vst [vmem:[#allocation2] sm:$0xff] %v1204
    // Predicated region
    $region38: #{tpu_custom_call.1} parent=1 // pred_check
      %p1278 = pneg %p65
    $region39: #{tpu_custom_call.1} parent=1 // pred_check_branch
      %1280 = sbr.rel (%p1278) target = $region41
    $region40: #{tpu_custom_call.1} parent=1 // pred_region
      %1281 = vst [vmem:[#allocation10] sm:$0xff] %v1204
    $region41: #{tpu_custom_call.1} parent=1 // pred_fallthru
      _
    // Predicated region
    $region42: #{tpu_custom_call.1} parent=1 // pred_check
      _
    $region43: #{tpu_custom_call.1} parent=1 // pred_check_branch
      %1283 = sbr.rel (0) target = $region45
    $region44: #{tpu_custom_call.1} parent=1 // pred_region
      %s1285 = ssub.s32 1024, 1024
      %1286 = vsyncadd [#allocation5], %s1285
      %s1287 = sshll.u32 [#allocation9], 4
      %s1288 = int_to_ptr.vmem [resolvable:$true] %s1287
      %1293 = dma.vmem_to_hbm [thread:$0]  %s1288, 1024, %s5, [#allocation5], 128, 128, 8
    $region45: #{tpu_custom_call.1} parent=1 // pred_fallthru
      _
    // Predicated region
    $region46: #{tpu_custom_call.1} parent=1 // pred_check
      _
    $region47: #{tpu_custom_call.1} parent=1 // pred_check_branch
      %1295 = sbr.rel (0) target = $region49
    $region48: #{tpu_custom_call.1} parent=1 // pred_region
      %s1297 = ssub.s32 128, 128
      %1298 = vsyncadd [#allocation11], %s1297
      %s1300 = sshll.u32 [#allocation10], 4
      %s1301 = int_to_ptr.vmem [resolvable:$true] %s1300
      %1303 = dma.vmem_to_hbm [thread:$0]  %s1301, 128, %s6, [#allocation11]
    $region49: #{tpu_custom_call.1} parent=1 // pred_fallthru
      _
    // Predicated region
    $region50: #{tpu_custom_call.1} parent=1 // pred_check
      _
    $region51: #{tpu_custom_call.1} parent=1 // pred_check_branch
      %1305 = sbr.rel (0) target = $region53
    $region52: #{tpu_custom_call.1} parent=1 // pred_region
      %1306 = dma.done [#allocation5], 1024
    $region53: #{tpu_custom_call.1} parent=1 // pred_fallthru
      _
    // Predicated region
    $region54: #{tpu_custom_call.1} parent=1 // pred_check
      _
    $region55: #{tpu_custom_call.1} parent=1 // pred_check_branch
      %1308 = sbr.rel (0) target = $region57
    $region56: #{tpu_custom_call.1} parent=1 // pred_region
      %1309 = dma.done [#allocation11], 128
    $region57: #{tpu_custom_call.1} parent=1 // pred_fallthru
      _
    %1310 = vsyncpa [#allocation4], 1
    %1311 = vsyncpa [#allocation7], 1
    %1312 = vsyncpa [#allocation5], 1
    %1313 = vsyncpa [#allocation11], 1

</llo_original>
